<compile_context>
chip_gen: v7x
topology: tpu7x:2x2x1
jax: 0.10.0
libtpu: 0.0.40
codegen_flags: <defaults>
</compile_context>

<pallas_src>
import math
import jax
import jax.numpy as jnp
from jax.experimental import pallas as pl
from jax.experimental.pallas import tpu as pltpu


def mhernn_kernel(x_ref, wx_ref, wh_ref, b_ref, wfc_ref, bfc_ref, out_ref):
    """Whole forward pass in one invocation.

    x_ref   : (T*B, I)  all timesteps, rows ordered time-major / batch-minor
    wx_ref  : (3, I, H) x2h weight, split per gate (r, z, n), pre-transposed
    wh_ref  : (3, H, H) h2h weight, split per gate, pre-transposed
    b_ref   : (3, 1, H) GRU extra bias, split per gate
    wfc_ref : (H, C)    fc weight, pre-transposed
    bfc_ref : (1, C)    fc bias
    out_ref : (B, C)    logits
    """
    B = out_ref.shape[0]
    TB = x_ref.shape[0]
    T = TB // B
    H = wh_ref.shape[-1]

    # ---- Hoisted input projection: one matmul per gate, off the serial chain.
    x_all = x_ref[...]                                                     # (T*B, I)
    gx_r = jnp.dot(x_all, wx_ref[0], preferred_element_type=jnp.float32)   # (T*B, H)
    gx_z = jnp.dot(x_all, wx_ref[1], preferred_element_type=jnp.float32)
    gx_n = jnp.dot(x_all, wx_ref[2], preferred_element_type=jnp.float32)

    # ---- Loop-invariant loads hoisted out of the recurrence.
    wh_r = wh_ref[0]
    wh_z = wh_ref[1]
    wh_n = wh_ref[2]
    b_r = b_ref[0]
    b_z = b_ref[1]
    b_n = b_ref[2]

    # ---- Recurrence, fully unrolled (T is static & small). Only the h @ Wh
    #      matmuls remain on the serial dependence chain.
    h = jnp.zeros((B, H), jnp.float32)
    for t in range(T):
        lo = t * B
        hi = lo + B
        i_r = gx_r[lo:hi]
        i_z = gx_z[lo:hi]
        i_n = gx_n[lo:hi]

        h_r = jnp.dot(h, wh_r, preferred_element_type=jnp.float32)
        h_z = jnp.dot(h, wh_z, preferred_element_type=jnp.float32)
        h_n = jnp.dot(h, wh_n, preferred_element_type=jnp.float32)

        reset_gate = jax.nn.sigmoid(i_r + h_r + b_r)
        update_gate = jax.nn.sigmoid(i_z + h_z + b_z)
        new_gate = jnp.tanh(i_n + reset_gate * h_n + b_n)
        h = new_gate + update_gate * (h - new_gate)

    # ---- Final Linear (C=10 < 128 lanes -> one masked store, negligible).
    out_ref[...] = (jnp.dot(h, wfc_ref[...], preferred_element_type=jnp.float32)
                    + bfc_ref[...])


def mhernn_forward(x, wx, wh, b, wfc, bfc):
    """x: (B, T, I) float32. Returns logits (B, num_classes) float32."""
    B, T, I = x.shape
    H3 = wx.shape[0]
    H = H3 // 3
    C = wfc.shape[0]

    # Glue: reshape/transpose weights once so the kernel sees lane-aligned,
    # per-gate, row-major operands.
    x_flat = jnp.transpose(x, (1, 0, 2)).reshape(T * B, I)       # (T*B, I), t-major
    wx3 = jnp.transpose(wx.reshape(3, H, I), (0, 2, 1))          # (3, I, H)
    wh3 = jnp.transpose(wh.reshape(3, H, H), (0, 2, 1))          # (3, H, H)
    b3 = b.reshape(3, 1, H)                                      # (3, 1, H)
    wfc_t = wfc.T                                                # (H, C)
    bfc2 = bfc.reshape(1, C)                                     # (1, C)

    return pl.pallas_call(
        mhernn_kernel,
        out_shape=jax.ShapeDtypeStruct((B, C), jnp.float32),
        grid_spec=pltpu.PrefetchScalarGridSpec(
            num_scalar_prefetch=0,
            grid=(1,),                       # single invocation; recurrence is in-kernel
            in_specs=[
                pl.BlockSpec((T * B, I), lambda i: (0, 0)),     # x (all timesteps)
                pl.BlockSpec((3, I, H), lambda i: (0, 0, 0)),   # Wx per-gate
                pl.BlockSpec((3, H, H), lambda i: (0, 0, 0)),   # Wh per-gate
                pl.BlockSpec((3, 1, H), lambda i: (0, 0, 0)),   # GRU bias per-gate
                pl.BlockSpec((H, C), lambda i: (0, 0)),         # Wfc^T
                pl.BlockSpec((1, C), lambda i: (0, 0)),         # fc bias
            ],
            out_specs=pl.BlockSpec((B, C), lambda i: (0, 0)),
        ),
        compiler_params=pltpu.CompilerParams(
            dimension_semantics=("arbitrary",)),
    )(x_flat, wx3, wh3, b3, wfc_t, bfc2)


def mhernn_reference(x, wx, wh, b, wfc, bfc):
    """Pure-JAX reference reproducing the PyTorch forward exactly."""
    B, T, I = x.shape
    H = wh.shape[1]
    h = jnp.zeros((B, H), jnp.float32)
    b_r, b_z, b_h = b[:H], b[H:2 * H], b[2 * H:]
    for t in range(T):
        gx = x[:, t, :] @ wx.T
        gh = h @ wh.T
        i_r, i_z, i_h = gx[:, :H], gx[:, H:2 * H], gx[:, 2 * H:]
        h_r, h_z, h_h = gh[:, :H], gh[:, H:2 * H], gh[:, 2 * H:]
        r = jax.nn.sigmoid(i_r + h_r + b_r)
        z = jax.nn.sigmoid(i_z + h_z + b_z)
        n = jnp.tanh(i_h + r * h_h + b_h)
        h = n + z * (h - n)
    return h @ wfc.T + bfc


if __name__ == "__main__":
    # Small shapes consistent with the module (MNIST-ish rows as the sequence).
    batch = 2
    seq_len = 8
    input_size = 28
    hidden_size = 32
    num_classes = 10

    key = jax.random.PRNGKey(0)
    k_x, k_wx, k_wh, k_b, k_wfc, k_bfc = jax.random.split(key, 6)

    # Deterministic parameter init mirroring reset_parameters: U(-std, std),
    # std = 1/sqrt(hidden_size); fc uses the same scheme for simplicity.
    std = 1.0 / math.sqrt(hidden_size)
    x = jax.random.normal(k_x, (batch, seq_len, input_size), jnp.float32)
    wx = jax.random.uniform(k_wx, (3 * hidden_size, input_size),
                            jnp.float32, -std, std)
    wh = jax.random.uniform(k_wh, (3 * hidden_size, hidden_size),
                            jnp.float32, -std, std)
    b = jax.random.uniform(k_b, (3 * hidden_size,), jnp.float32, -std, std)
    wfc = jax.random.uniform(k_wfc, (num_classes, hidden_size),
                             jnp.float32, -std, std)
    bfc = jax.random.uniform(k_bfc, (num_classes,), jnp.float32, -std, std)

    logits = mhernn_forward(x, wx, wh, b, wfc, bfc)
    logits = jax.block_until_ready(logits)

    ref = mhernn_reference(x, wx, wh, b, wfc, bfc)
    assert logits.shape == (batch, num_classes)
    assert jnp.allclose(logits, ref, atol=1e-4, rtol=1e-4), "mismatch vs reference"

    print("KERNEL_OK")
</pallas_src>

<mosaic_0001>
module attributes {stable_mosaic.version = 11 : i64} {
  func.func @mhernn_kernel(%arg0: i32, %arg1: memref<16x28xf32, #tpu.memory_space<vmem>>, %arg2: memref<3x28x32xf32, #tpu.memory_space<vmem>>, %arg3: memref<3x32x32xf32, #tpu.memory_space<vmem>>, %arg4: memref<3x1x32xf32, #tpu.memory_space<vmem>>, %arg5: memref<32x10xf32, #tpu.memory_space<vmem>>, %arg6: memref<1x10xf32, #tpu.memory_space<vmem>>, %arg7: memref<2x10xf32, #tpu.memory_space<vmem>>) attributes {dimension_semantics = [#tpu.dimension_semantics<arbitrary>], iteration_bounds = array<i64: 1>, scalar_prefetch = 0 : i64, scratch_operands = 0 : i64, tpu.core_type = #tpu.core_type<tc>, window_params = [{pipeline_mode = #tpu.pipeline_mode<synchronous>, transform_indices = @transform_0, window_bounds = array<i64: 16, 28>}, {pipeline_mode = #tpu.pipeline_mode<synchronous>, transform_indices = @transform_1, window_bounds = array<i64: 3, 28, 32>}, {pipeline_mode = #tpu.pipeline_mode<synchronous>, transform_indices = @transform_2, window_bounds = array<i64: 3, 32, 32>}, {pipeline_mode = #tpu.pipeline_mode<synchronous>, transform_indices = @transform_3, window_bounds = array<i64: 3, 1, 32>}, {pipeline_mode = #tpu.pipeline_mode<synchronous>, transform_indices = @transform_4, window_bounds = array<i64: 32, 10>}, {pipeline_mode = #tpu.pipeline_mode<synchronous>, transform_indices = @transform_5, window_bounds = array<i64: 1, 10>}, {pipeline_mode = #tpu.pipeline_mode<synchronous>, transform_indices = @transform_6, window_bounds = array<i64: 2, 10>}]} {
    %c0 = arith.constant 0 : index
    %c0_0 = arith.constant 0 : index
    %0 = vector.load %arg1[%c0, %c0_0] : memref<16x28xf32, #tpu.memory_space<vmem>>, vector<16x28xf32>
    %c0_1 = arith.constant 0 : index
    %c0_2 = arith.constant 0 : index
    %c0_3 = arith.constant 0 : index
    %1 = vector.load %arg2[%c0_1, %c0_2, %c0_3] : memref<3x28x32xf32, #tpu.memory_space<vmem>>, vector<1x28x32xf32>
    %2 = vector.shape_cast %1 : vector<1x28x32xf32> to vector<28x32xf32>
    %cst = arith.constant dense<0.000000e+00> : vector<16x32xf32>
    %3 = tpu.matmul %0, %2, %cst {dimension_numbers = #tpu.dot_dimension_numbers<[1], [0], [0], [1], [0, 0, 1, 1], [], []>} : vector<16x28xf32>, vector<28x32xf32>, vector<16x32xf32> -> vector<16x32xf32>
    %c1 = arith.constant 1 : index
    %c0_4 = arith.constant 0 : index
    %c0_5 = arith.constant 0 : index
    %4 = vector.load %arg2[%c1, %c0_4, %c0_5] : memref<3x28x32xf32, #tpu.memory_space<vmem>>, vector<1x28x32xf32>
    %5 = vector.shape_cast %4 : vector<1x28x32xf32> to vector<28x32xf32>
    %cst_6 = arith.constant dense<0.000000e+00> : vector<16x32xf32>
    %6 = tpu.matmul %0, %5, %cst_6 {dimension_numbers = #tpu.dot_dimension_numbers<[1], [0], [0], [1], [0, 0, 1, 1], [], []>} : vector<16x28xf32>, vector<28x32xf32>, vector<16x32xf32> -> vector<16x32xf32>
    %c2 = arith.constant 2 : index
    %c0_7 = arith.constant 0 : index
    %c0_8 = arith.constant 0 : index
    %7 = vector.load %arg2[%c2, %c0_7, %c0_8] : memref<3x28x32xf32, #tpu.memory_space<vmem>>, vector<1x28x32xf32>
    %8 = vector.shape_cast %7 : vector<1x28x32xf32> to vector<28x32xf32>
    %cst_9 = arith.constant dense<0.000000e+00> : vector<16x32xf32>
    %9 = tpu.matmul %0, %8, %cst_9 {dimension_numbers = #tpu.dot_dimension_numbers<[1], [0], [0], [1], [0, 0, 1, 1], [], []>} : vector<16x28xf32>, vector<28x32xf32>, vector<16x32xf32> -> vector<16x32xf32>
    %c0_10 = arith.constant 0 : index
    %c0_11 = arith.constant 0 : index
    %c0_12 = arith.constant 0 : index
    %10 = vector.load %arg3[%c0_10, %c0_11, %c0_12] : memref<3x32x32xf32, #tpu.memory_space<vmem>>, vector<1x32x32xf32>
    %11 = vector.shape_cast %10 : vector<1x32x32xf32> to vector<32x32xf32>
    %c1_13 = arith.constant 1 : index
    %c0_14 = arith.constant 0 : index
    %c0_15 = arith.constant 0 : index
    %12 = vector.load %arg3[%c1_13, %c0_14, %c0_15] : memref<3x32x32xf32, #tpu.memory_space<vmem>>, vector<1x32x32xf32>
    %13 = vector.shape_cast %12 : vector<1x32x32xf32> to vector<32x32xf32>
    %c2_16 = arith.constant 2 : index
    %c0_17 = arith.constant 0 : index
    %c0_18 = arith.constant 0 : index
    %14 = vector.load %arg3[%c2_16, %c0_17, %c0_18] : memref<3x32x32xf32, #tpu.memory_space<vmem>>, vector<1x32x32xf32>
    %15 = vector.shape_cast %14 : vector<1x32x32xf32> to vector<32x32xf32>
    %c0_19 = arith.constant 0 : index
    %c0_20 = arith.constant 0 : index
    %c0_21 = arith.constant 0 : index
    %16 = vector.load %arg4[%c0_19, %c0_20, %c0_21] : memref<3x1x32xf32, #tpu.memory_space<vmem>>, vector<1x1x32xf32>
    %17 = vector.shape_cast %16 : vector<1x1x32xf32> to vector<1x32xf32>
    %c1_22 = arith.constant 1 : index
    %c0_23 = arith.constant 0 : index
    %c0_24 = arith.constant 0 : index
    %18 = vector.load %arg4[%c1_22, %c0_23, %c0_24] : memref<3x1x32xf32, #tpu.memory_space<vmem>>, vector<1x1x32xf32>
    %19 = vector.shape_cast %18 : vector<1x1x32xf32> to vector<1x32xf32>
    %c2_25 = arith.constant 2 : index
    %c0_26 = arith.constant 0 : index
    %c0_27 = arith.constant 0 : index
    %20 = vector.load %arg4[%c2_25, %c0_26, %c0_27] : memref<3x1x32xf32, #tpu.memory_space<vmem>>, vector<1x1x32xf32>
    %21 = vector.shape_cast %20 : vector<1x1x32xf32> to vector<1x32xf32>
    %cst_28 = arith.constant 0.000000e+00 : f32
    %22 = vector.broadcast %cst_28 : f32 to vector<2x32xf32>
    %23 = vector.extract_strided_slice %3 {offsets = [0, 0], sizes = [2, 32], strides = [1, 1]} : vector<16x32xf32> to vector<2x32xf32>
    %24 = vector.extract_strided_slice %6 {offsets = [0, 0], sizes = [2, 32], strides = [1, 1]} : vector<16x32xf32> to vector<2x32xf32>
    %25 = vector.extract_strided_slice %9 {offsets = [0, 0], sizes = [2, 32], strides = [1, 1]} : vector<16x32xf32> to vector<2x32xf32>
    %cst_29 = arith.constant dense<0.000000e+00> : vector<2x32xf32>
    %26 = tpu.matmul %22, %11, %cst_29 {dimension_numbers = #tpu.dot_dimension_numbers<[1], [0], [0], [1], [0, 0, 1, 1], [], []>} : vector<2x32xf32>, vector<32x32xf32>, vector<2x32xf32> -> vector<2x32xf32>
    %cst_30 = arith.constant dense<0.000000e+00> : vector<2x32xf32>
    %27 = tpu.matmul %22, %13, %cst_30 {dimension_numbers = #tpu.dot_dimension_numbers<[1], [0], [0], [1], [0, 0, 1, 1], [], []>} : vector<2x32xf32>, vector<32x32xf32>, vector<2x32xf32> -> vector<2x32xf32>
    %cst_31 = arith.constant dense<0.000000e+00> : vector<2x32xf32>
    %28 = tpu.matmul %22, %15, %cst_31 {dimension_numbers = #tpu.dot_dimension_numbers<[1], [0], [0], [1], [0, 0, 1, 1], [], []>} : vector<2x32xf32>, vector<32x32xf32>, vector<2x32xf32> -> vector<2x32xf32>
    %29 = arith.addf %23, %26 : vector<2x32xf32>
    %30 = vector.broadcast %17 : vector<1x32xf32> to vector<2x32xf32>
    %31 = arith.addf %29, %30 : vector<2x32xf32>
    %32 = arith.negf %31 : vector<2x32xf32>
    %33 = math.exp %32 : vector<2x32xf32>
    %cst_32 = arith.constant 1.000000e+00 : f32
    %34 = vector.broadcast %cst_32 : f32 to vector<2x32xf32>
    %35 = arith.addf %34, %33 : vector<2x32xf32>
    %36 = arith.divf %34, %35 : vector<2x32xf32>
    %37 = arith.addf %24, %27 : vector<2x32xf32>
    %38 = vector.broadcast %19 : vector<1x32xf32> to vector<2x32xf32>
    %39 = arith.addf %37, %38 : vector<2x32xf32>
    %40 = arith.negf %39 : vector<2x32xf32>
    %41 = math.exp %40 : vector<2x32xf32>
    %cst_33 = arith.constant 1.000000e+00 : f32
    %42 = vector.broadcast %cst_33 : f32 to vector<2x32xf32>
    %43 = arith.addf %42, %41 : vector<2x32xf32>
    %44 = arith.divf %42, %43 : vector<2x32xf32>
    %45 = arith.mulf %36, %28 : vector<2x32xf32>
    %46 = arith.addf %25, %45 : vector<2x32xf32>
    %47 = vector.broadcast %21 : vector<1x32xf32> to vector<2x32xf32>
    %48 = arith.addf %46, %47 : vector<2x32xf32>
    %49 = math.tanh %48 : vector<2x32xf32>
    %50 = arith.subf %22, %49 : vector<2x32xf32>
    %51 = arith.mulf %44, %50 : vector<2x32xf32>
    %52 = arith.addf %49, %51 : vector<2x32xf32>
    %53 = vector.extract_strided_slice %3 {offsets = [2, 0], sizes = [2, 32], strides = [1, 1]} : vector<16x32xf32> to vector<2x32xf32>
    %54 = vector.extract_strided_slice %6 {offsets = [2, 0], sizes = [2, 32], strides = [1, 1]} : vector<16x32xf32> to vector<2x32xf32>
    %55 = vector.extract_strided_slice %9 {offsets = [2, 0], sizes = [2, 32], strides = [1, 1]} : vector<16x32xf32> to vector<2x32xf32>
    %cst_34 = arith.constant dense<0.000000e+00> : vector<2x32xf32>
    %56 = tpu.matmul %52, %11, %cst_34 {dimension_numbers = #tpu.dot_dimension_numbers<[1], [0], [0], [1], [0, 0, 1, 1], [], []>} : vector<2x32xf32>, vector<32x32xf32>, vector<2x32xf32> -> vector<2x32xf32>
    %cst_35 = arith.constant dense<0.000000e+00> : vector<2x32xf32>
    %57 = tpu.matmul %52, %13, %cst_35 {dimension_numbers = #tpu.dot_dimension_numbers<[1], [0], [0], [1], [0, 0, 1, 1], [], []>} : vector<2x32xf32>, vector<32x32xf32>, vector<2x32xf32> -> vector<2x32xf32>
    %cst_36 = arith.constant dense<0.000000e+00> : vector<2x32xf32>
    %58 = tpu.matmul %52, %15, %cst_36 {dimension_numbers = #tpu.dot_dimension_numbers<[1], [0], [0], [1], [0, 0, 1, 1], [], []>} : vector<2x32xf32>, vector<32x32xf32>, vector<2x32xf32> -> vector<2x32xf32>
    %59 = arith.addf %53, %56 : vector<2x32xf32>
    %60 = vector.broadcast %17 : vector<1x32xf32> to vector<2x32xf32>
    %61 = arith.addf %59, %60 : vector<2x32xf32>
    %62 = arith.negf %61 : vector<2x32xf32>
    %63 = math.exp %62 : vector<2x32xf32>
    %cst_37 = arith.constant 1.000000e+00 : f32
    %64 = vector.broadcast %cst_37 : f32 to vector<2x32xf32>
    %65 = arith.addf %64, %63 : vector<2x32xf32>
    %66 = arith.divf %64, %65 : vector<2x32xf32>
    %67 = arith.addf %54, %57 : vector<2x32xf32>
    %68 = vector.broadcast %19 : vector<1x32xf32> to vector<2x32xf32>
    %69 = arith.addf %67, %68 : vector<2x32xf32>
    %70 = arith.negf %69 : vector<2x32xf32>
    %71 = math.exp %70 : vector<2x32xf32>
    %cst_38 = arith.constant 1.000000e+00 : f32
    %72 = vector.broadcast %cst_38 : f32 to vector<2x32xf32>
    %73 = arith.addf %72, %71 : vector<2x32xf32>
    %74 = arith.divf %72, %73 : vector<2x32xf32>
    %75 = arith.mulf %66, %58 : vector<2x32xf32>
    %76 = arith.addf %55, %75 : vector<2x32xf32>
    %77 = vector.broadcast %21 : vector<1x32xf32> to vector<2x32xf32>
    %78 = arith.addf %76, %77 : vector<2x32xf32>
    %79 = math.tanh %78 : vector<2x32xf32>
    %80 = arith.subf %52, %79 : vector<2x32xf32>
    %81 = arith.mulf %74, %80 : vector<2x32xf32>
    %82 = arith.addf %79, %81 : vector<2x32xf32>
    %83 = vector.extract_strided_slice %3 {offsets = [4, 0], sizes = [2, 32], strides = [1, 1]} : vector<16x32xf32> to vector<2x32xf32>
    %84 = vector.extract_strided_slice %6 {offsets = [4, 0], sizes = [2, 32], strides = [1, 1]} : vector<16x32xf32> to vector<2x32xf32>
    %85 = vector.extract_strided_slice %9 {offsets = [4, 0], sizes = [2, 32], strides = [1, 1]} : vector<16x32xf32> to vector<2x32xf32>
    %cst_39 = arith.constant dense<0.000000e+00> : vector<2x32xf32>
    %86 = tpu.matmul %82, %11, %cst_39 {dimension_numbers = #tpu.dot_dimension_numbers<[1], [0], [0], [1], [0, 0, 1, 1], [], []>} : vector<2x32xf32>, vector<32x32xf32>, vector<2x32xf32> -> vector<2x32xf32>
    %cst_40 = arith.constant dense<0.000000e+00> : vector<2x32xf32>
    %87 = tpu.matmul %82, %13, %cst_40 {dimension_numbers = #tpu.dot_dimension_numbers<[1], [0], [0], [1], [0, 0, 1, 1], [], []>} : vector<2x32xf32>, vector<32x32xf32>, vector<2x32xf32> -> vector<2x32xf32>
    %cst_41 = arith.constant dense<0.000000e+00> : vector<2x32xf32>
    %88 = tpu.matmul %82, %15, %cst_41 {dimension_numbers = #tpu.dot_dimension_numbers<[1], [0], [0], [1], [0, 0, 1, 1], [], []>} : vector<2x32xf32>, vector<32x32xf32>, vector<2x32xf32> -> vector<2x32xf32>
    %89 = arith.addf %83, %86 : vector<2x32xf32>
    %90 = vector.broadcast %17 : vector<1x32xf32> to vector<2x32xf32>
    %91 = arith.addf %89, %90 : vector<2x32xf32>
    %92 = arith.negf %91 : vector<2x32xf32>
    %93 = math.exp %92 : vector<2x32xf32>
    %cst_42 = arith.constant 1.000000e+00 : f32
    %94 = vector.broadcast %cst_42 : f32 to vector<2x32xf32>
    %95 = arith.addf %94, %93 : vector<2x32xf32>
    %96 = arith.divf %94, %95 : vector<2x32xf32>
    %97 = arith.addf %84, %87 : vector<2x32xf32>
    %98 = vector.broadcast %19 : vector<1x32xf32> to vector<2x32xf32>
    %99 = arith.addf %97, %98 : vector<2x32xf32>
    %100 = arith.negf %99 : vector<2x32xf32>
    %101 = math.exp %100 : vector<2x32xf32>
    %cst_43 = arith.constant 1.000000e+00 : f32
    %102 = vector.broadcast %cst_43 : f32 to vector<2x32xf32>
    %103 = arith.addf %102, %101 : vector<2x32xf32>
    %104 = arith.divf %102, %103 : vector<2x32xf32>
    %105 = arith.mulf %96, %88 : vector<2x32xf32>
    %106 = arith.addf %85, %105 : vector<2x32xf32>
    %107 = vector.broadcast %21 : vector<1x32xf32> to vector<2x32xf32>
    %108 = arith.addf %106, %107 : vector<2x32xf32>
    %109 = math.tanh %108 : vector<2x32xf32>
    %110 = arith.subf %82, %109 : vector<2x32xf32>
    %111 = arith.mulf %104, %110 : vector<2x32xf32>
    %112 = arith.addf %109, %111 : vector<2x32xf32>
    %113 = vector.extract_strided_slice %3 {offsets = [6, 0], sizes = [2, 32], strides = [1, 1]} : vector<16x32xf32> to vector<2x32xf32>
    %114 = vector.extract_strided_slice %6 {offsets = [6, 0], sizes = [2, 32], strides = [1, 1]} : vector<16x32xf32> to vector<2x32xf32>
    %115 = vector.extract_strided_slice %9 {offsets = [6, 0], sizes = [2, 32], strides = [1, 1]} : vector<16x32xf32> to vector<2x32xf32>
    %cst_44 = arith.constant dense<0.000000e+00> : vector<2x32xf32>
    %116 = tpu.matmul %112, %11, %cst_44 {dimension_numbers = #tpu.dot_dimension_numbers<[1], [0], [0], [1], [0, 0, 1, 1], [], []>} : vector<2x32xf32>, vector<32x32xf32>, vector<2x32xf32> -> vector<2x32xf32>
    %cst_45 = arith.constant dense<0.000000e+00> : vector<2x32xf32>
    %117 = tpu.matmul %112, %13, %cst_45 {dimension_numbers = #tpu.dot_dimension_numbers<[1], [0], [0], [1], [0, 0, 1, 1], [], []>} : vector<2x32xf32>, vector<32x32xf32>, vector<2x32xf32> -> vector<2x32xf32>
    %cst_46 = arith.constant dense<0.000000e+00> : vector<2x32xf32>
    %118 = tpu.matmul %112, %15, %cst_46 {dimension_numbers = #tpu.dot_dimension_numbers<[1], [0], [0], [1], [0, 0, 1, 1], [], []>} : vector<2x32xf32>, vector<32x32xf32>, vector<2x32xf32> -> vector<2x32xf32>
    %119 = arith.addf %113, %116 : vector<2x32xf32>
    %120 = vector.broadcast %17 : vector<1x32xf32> to vector<2x32xf32>
    %121 = arith.addf %119, %120 : vector<2x32xf32>
    %122 = arith.negf %121 : vector<2x32xf32>
    %123 = math.exp %122 : vector<2x32xf32>
    %cst_47 = arith.constant 1.000000e+00 : f32
    %124 = vector.broadcast %cst_47 : f32 to vector<2x32xf32>
    %125 = arith.addf %124, %123 : vector<2x32xf32>
    %126 = arith.divf %124, %125 : vector<2x32xf32>
    %127 = arith.addf %114, %117 : vector<2x32xf32>
    %128 = vector.broadcast %19 : vector<1x32xf32> to vector<2x32xf32>
    %129 = arith.addf %127, %128 : vector<2x32xf32>
    %130 = arith.negf %129 : vector<2x32xf32>
    %131 = math.exp %130 : vector<2x32xf32>
    %cst_48 = arith.constant 1.000000e+00 : f32
    %132 = vector.broadcast %cst_48 : f32 to vector<2x32xf32>
    %133 = arith.addf %132, %131 : vector<2x32xf32>
    %134 = arith.divf %132, %133 : vector<2x32xf32>
    %135 = arith.mulf %126, %118 : vector<2x32xf32>
    %136 = arith.addf %115, %135 : vector<2x32xf32>
    %137 = vector.broadcast %21 : vector<1x32xf32> to vector<2x32xf32>
    %138 = arith.addf %136, %137 : vector<2x32xf32>
    %139 = math.tanh %138 : vector<2x32xf32>
    %140 = arith.subf %112, %139 : vector<2x32xf32>
    %141 = arith.mulf %134, %140 : vector<2x32xf32>
    %142 = arith.addf %139, %141 : vector<2x32xf32>
    %143 = vector.extract_strided_slice %3 {offsets = [8, 0], sizes = [2, 32], strides = [1, 1]} : vector<16x32xf32> to vector<2x32xf32>
    %144 = vector.extract_strided_slice %6 {offsets = [8, 0], sizes = [2, 32], strides = [1, 1]} : vector<16x32xf32> to vector<2x32xf32>
    %145 = vector.extract_strided_slice %9 {offsets = [8, 0], sizes = [2, 32], strides = [1, 1]} : vector<16x32xf32> to vector<2x32xf32>
    %cst_49 = arith.constant dense<0.000000e+00> : vector<2x32xf32>
    %146 = tpu.matmul %142, %11, %cst_49 {dimension_numbers = #tpu.dot_dimension_numbers<[1], [0], [0], [1], [0, 0, 1, 1], [], []>} : vector<2x32xf32>, vector<32x32xf32>, vector<2x32xf32> -> vector<2x32xf32>
    %cst_50 = arith.constant dense<0.000000e+00> : vector<2x32xf32>
    %147 = tpu.matmul %142, %13, %cst_50 {dimension_numbers = #tpu.dot_dimension_numbers<[1], [0], [0], [1], [0, 0, 1, 1], [], []>} : vector<2x32xf32>, vector<32x32xf32>, vector<2x32xf32> -> vector<2x32xf32>
    %cst_51 = arith.constant dense<0.000000e+00> : vector<2x32xf32>
    %148 = tpu.matmul %142, %15, %cst_51 {dimension_numbers = #tpu.dot_dimension_numbers<[1], [0], [0], [1], [0, 0, 1, 1], [], []>} : vector<2x32xf32>, vector<32x32xf32>, vector<2x32xf32> -> vector<2x32xf32>
    %149 = arith.addf %143, %146 : vector<2x32xf32>
    %150 = vector.broadcast %17 : vector<1x32xf32> to vector<2x32xf32>
    %151 = arith.addf %149, %150 : vector<2x32xf32>
    %152 = arith.negf %151 : vector<2x32xf32>
    %153 = math.exp %152 : vector<2x32xf32>
    %cst_52 = arith.constant 1.000000e+00 : f32
    %154 = vector.broadcast %cst_52 : f32 to vector<2x32xf32>
    %155 = arith.addf %154, %153 : vector<2x32xf32>
    %156 = arith.divf %154, %155 : vector<2x32xf32>
    %157 = arith.addf %144, %147 : vector<2x32xf32>
    %158 = vector.broadcast %19 : vector<1x32xf32> to vector<2x32xf32>
    %159 = arith.addf %157, %158 : vector<2x32xf32>
    %160 = arith.negf %159 : vector<2x32xf32>
    %161 = math.exp %160 : vector<2x32xf32>
    %cst_53 = arith.constant 1.000000e+00 : f32
    %162 = vector.broadcast %cst_53 : f32 to vector<2x32xf32>
    %163 = arith.addf %162, %161 : vector<2x32xf32>
    %164 = arith.divf %162, %163 : vector<2x32xf32>
    %165 = arith.mulf %156, %148 : vector<2x32xf32>
    %166 = arith.addf %145, %165 : vector<2x32xf32>
    %167 = vector.broadcast %21 : vector<1x32xf32> to vector<2x32xf32>
    %168 = arith.addf %166, %167 : vector<2x32xf32>
    %169 = math.tanh %168 : vector<2x32xf32>
    %170 = arith.subf %142, %169 : vector<2x32xf32>
    %171 = arith.mulf %164, %170 : vector<2x32xf32>
    %172 = arith.addf %169, %171 : vector<2x32xf32>
    %173 = vector.extract_strided_slice %3 {offsets = [10, 0], sizes = [2, 32], strides = [1, 1]} : vector<16x32xf32> to vector<2x32xf32>
    %174 = vector.extract_strided_slice %6 {offsets = [10, 0], sizes = [2, 32], strides = [1, 1]} : vector<16x32xf32> to vector<2x32xf32>
    %175 = vector.extract_strided_slice %9 {offsets = [10, 0], sizes = [2, 32], strides = [1, 1]} : vector<16x32xf32> to vector<2x32xf32>
    %cst_54 = arith.constant dense<0.000000e+00> : vector<2x32xf32>
    %176 = tpu.matmul %172, %11, %cst_54 {dimension_numbers = #tpu.dot_dimension_numbers<[1], [0], [0], [1], [0, 0, 1, 1], [], []>} : vector<2x32xf32>, vector<32x32xf32>, vector<2x32xf32> -> vector<2x32xf32>
    %cst_55 = arith.constant dense<0.000000e+00> : vector<2x32xf32>
    %177 = tpu.matmul %172, %13, %cst_55 {dimension_numbers = #tpu.dot_dimension_numbers<[1], [0], [0], [1], [0, 0, 1, 1], [], []>} : vector<2x32xf32>, vector<32x32xf32>, vector<2x32xf32> -> vector<2x32xf32>
    %cst_56 = arith.constant dense<0.000000e+00> : vector<2x32xf32>
    %178 = tpu.matmul %172, %15, %cst_56 {dimension_numbers = #tpu.dot_dimension_numbers<[1], [0], [0], [1], [0, 0, 1, 1], [], []>} : vector<2x32xf32>, vector<32x32xf32>, vector<2x32xf32> -> vector<2x32xf32>
    %179 = arith.addf %173, %176 : vector<2x32xf32>
    %180 = vector.broadcast %17 : vector<1x32xf32> to vector<2x32xf32>
    %181 = arith.addf %179, %180 : vector<2x32xf32>
    %182 = arith.negf %181 : vector<2x32xf32>
    %183 = math.exp %182 : vector<2x32xf32>
    %cst_57 = arith.constant 1.000000e+00 : f32
    %184 = vector.broadcast %cst_57 : f32 to vector<2x32xf32>
    %185 = arith.addf %184, %183 : vector<2x32xf32>
    %186 = arith.divf %184, %185 : vector<2x32xf32>
    %187 = arith.addf %174, %177 : vector<2x32xf32>
    %188 = vector.broadcast %19 : vector<1x32xf32> to vector<2x32xf32>
    %189 = arith.addf %187, %188 : vector<2x32xf32>
    %190 = arith.negf %189 : vector<2x32xf32>
    %191 = math.exp %190 : vector<2x32xf32>
    %cst_58 = arith.constant 1.000000e+00 : f32
    %192 = vector.broadcast %cst_58 : f32 to vector<2x32xf32>
    %193 = arith.addf %192, %191 : vector<2x32xf32>
    %194 = arith.divf %192, %193 : vector<2x32xf32>
    %195 = arith.mulf %186, %178 : vector<2x32xf32>
    %196 = arith.addf %175, %195 : vector<2x32xf32>
    %197 = vector.broadcast %21 : vector<1x32xf32> to vector<2x32xf32>
    %198 = arith.addf %196, %197 : vector<2x32xf32>
    %199 = math.tanh %198 : vector<2x32xf32>
    %200 = arith.subf %172, %199 : vector<2x32xf32>
    %201 = arith.mulf %194, %200 : vector<2x32xf32>
    %202 = arith.addf %199, %201 : vector<2x32xf32>
    %203 = vector.extract_strided_slice %3 {offsets = [12, 0], sizes = [2, 32], strides = [1, 1]} : vector<16x32xf32> to vector<2x32xf32>
    %204 = vector.extract_strided_slice %6 {offsets = [12, 0], sizes = [2, 32], strides = [1, 1]} : vector<16x32xf32> to vector<2x32xf32>
    %205 = vector.extract_strided_slice %9 {offsets = [12, 0], sizes = [2, 32], strides = [1, 1]} : vector<16x32xf32> to vector<2x32xf32>
    %cst_59 = arith.constant dense<0.000000e+00> : vector<2x32xf32>
    %206 = tpu.matmul %202, %11, %cst_59 {dimension_numbers = #tpu.dot_dimension_numbers<[1], [0], [0], [1], [0, 0, 1, 1], [], []>} : vector<2x32xf32>, vector<32x32xf32>, vector<2x32xf32> -> vector<2x32xf32>
    %cst_60 = arith.constant dense<0.000000e+00> : vector<2x32xf32>
    %207 = tpu.matmul %202, %13, %cst_60 {dimension_numbers = #tpu.dot_dimension_numbers<[1], [0], [0], [1], [0, 0, 1, 1], [], []>} : vector<2x32xf32>, vector<32x32xf32>, vector<2x32xf32> -> vector<2x32xf32>
    %cst_61 = arith.constant dense<0.000000e+00> : vector<2x32xf32>
    %208 = tpu.matmul %202, %15, %cst_61 {dimension_numbers = #tpu.dot_dimension_numbers<[1], [0], [0], [1], [0, 0, 1, 1], [], []>} : vector<2x32xf32>, vector<32x32xf32>, vector<2x32xf32> -> vector<2x32xf32>
    %209 = arith.addf %203, %206 : vector<2x32xf32>
    %210 = vector.broadcast %17 : vector<1x32xf32> to vector<2x32xf32>
    %211 = arith.addf %209, %210 : vector<2x32xf32>
    %212 = arith.negf %211 : vector<2x32xf32>
    %213 = math.exp %212 : vector<2x32xf32>
    %cst_62 = arith.constant 1.000000e+00 : f32
    %214 = vector.broadcast %cst_62 : f32 to vector<2x32xf32>
    %215 = arith.addf %214, %213 : vector<2x32xf32>
    %216 = arith.divf %214, %215 : vector<2x32xf32>
    %217 = arith.addf %204, %207 : vector<2x32xf32>
    %218 = vector.broadcast %19 : vector<1x32xf32> to vector<2x32xf32>
    %219 = arith.addf %217, %218 : vector<2x32xf32>
    %220 = arith.negf %219 : vector<2x32xf32>
    %221 = math.exp %220 : vector<2x32xf32>
    %cst_63 = arith.constant 1.000000e+00 : f32
    %222 = vector.broadcast %cst_63 : f32 to vector<2x32xf32>
    %223 = arith.addf %222, %221 : vector<2x32xf32>
    %224 = arith.divf %222, %223 : vector<2x32xf32>
    %225 = arith.mulf %216, %208 : vector<2x32xf32>
    %226 = arith.addf %205, %225 : vector<2x32xf32>
    %227 = vector.broadcast %21 : vector<1x32xf32> to vector<2x32xf32>
    %228 = arith.addf %226, %227 : vector<2x32xf32>
    %229 = math.tanh %228 : vector<2x32xf32>
    %230 = arith.subf %202, %229 : vector<2x32xf32>
    %231 = arith.mulf %224, %230 : vector<2x32xf32>
    %232 = arith.addf %229, %231 : vector<2x32xf32>
    %233 = vector.extract_strided_slice %3 {offsets = [14, 0], sizes = [2, 32], strides = [1, 1]} : vector<16x32xf32> to vector<2x32xf32>
    %234 = vector.extract_strided_slice %6 {offsets = [14, 0], sizes = [2, 32], strides = [1, 1]} : vector<16x32xf32> to vector<2x32xf32>
    %235 = vector.extract_strided_slice %9 {offsets = [14, 0], sizes = [2, 32], strides = [1, 1]} : vector<16x32xf32> to vector<2x32xf32>
    %cst_64 = arith.constant dense<0.000000e+00> : vector<2x32xf32>
    %236 = tpu.matmul %232, %11, %cst_64 {dimension_numbers = #tpu.dot_dimension_numbers<[1], [0], [0], [1], [0, 0, 1, 1], [], []>} : vector<2x32xf32>, vector<32x32xf32>, vector<2x32xf32> -> vector<2x32xf32>
    %cst_65 = arith.constant dense<0.000000e+00> : vector<2x32xf32>
    %237 = tpu.matmul %232, %13, %cst_65 {dimension_numbers = #tpu.dot_dimension_numbers<[1], [0], [0], [1], [0, 0, 1, 1], [], []>} : vector<2x32xf32>, vector<32x32xf32>, vector<2x32xf32> -> vector<2x32xf32>
    %cst_66 = arith.constant dense<0.000000e+00> : vector<2x32xf32>
    %238 = tpu.matmul %232, %15, %cst_66 {dimension_numbers = #tpu.dot_dimension_numbers<[1], [0], [0], [1], [0, 0, 1, 1], [], []>} : vector<2x32xf32>, vector<32x32xf32>, vector<2x32xf32> -> vector<2x32xf32>
    %239 = arith.addf %233, %236 : vector<2x32xf32>
    %240 = vector.broadcast %17 : vector<1x32xf32> to vector<2x32xf32>
    %241 = arith.addf %239, %240 : vector<2x32xf32>
    %242 = arith.negf %241 : vector<2x32xf32>
    %243 = math.exp %242 : vector<2x32xf32>
    %cst_67 = arith.constant 1.000000e+00 : f32
    %244 = vector.broadcast %cst_67 : f32 to vector<2x32xf32>
    %245 = arith.addf %244, %243 : vector<2x32xf32>
    %246 = arith.divf %244, %245 : vector<2x32xf32>
    %247 = arith.addf %234, %237 : vector<2x32xf32>
    %248 = vector.broadcast %19 : vector<1x32xf32> to vector<2x32xf32>
    %249 = arith.addf %247, %248 : vector<2x32xf32>
    %250 = arith.negf %249 : vector<2x32xf32>
    %251 = math.exp %250 : vector<2x32xf32>
    %cst_68 = arith.constant 1.000000e+00 : f32
    %252 = vector.broadcast %cst_68 : f32 to vector<2x32xf32>
    %253 = arith.addf %252, %251 : vector<2x32xf32>
    %254 = arith.divf %252, %253 : vector<2x32xf32>
    %255 = arith.mulf %246, %238 : vector<2x32xf32>
    %256 = arith.addf %235, %255 : vector<2x32xf32>
    %257 = vector.broadcast %21 : vector<1x32xf32> to vector<2x32xf32>
    %258 = arith.addf %256, %257 : vector<2x32xf32>
    %259 = math.tanh %258 : vector<2x32xf32>
    %260 = arith.subf %232, %259 : vector<2x32xf32>
    %261 = arith.mulf %254, %260 : vector<2x32xf32>
    %262 = arith.addf %259, %261 : vector<2x32xf32>
    %c0_69 = arith.constant 0 : index
    %c0_70 = arith.constant 0 : index
    %263 = vector.load %arg5[%c0_69, %c0_70] : memref<32x10xf32, #tpu.memory_space<vmem>>, vector<32x10xf32>
    %cst_71 = arith.constant dense<0.000000e+00> : vector<2x10xf32>
    %264 = tpu.matmul %262, %263, %cst_71 {dimension_numbers = #tpu.dot_dimension_numbers<[1], [0], [0], [1], [0, 0, 1, 1], [], []>} : vector<2x32xf32>, vector<32x10xf32>, vector<2x10xf32> -> vector<2x10xf32>
    %c0_72 = arith.constant 0 : index
    %c0_73 = arith.constant 0 : index
    %265 = vector.load %arg6[%c0_72, %c0_73] : memref<1x10xf32, #tpu.memory_space<vmem>>, vector<1x10xf32>
    %266 = vector.broadcast %265 : vector<1x10xf32> to vector<2x10xf32>
    %267 = arith.addf %264, %266 : vector<2x10xf32>
    %c0_74 = arith.constant 0 : index
    %c0_75 = arith.constant 0 : index
    %268 = vector.load %arg7[%c0_74, %c0_75] : memref<2x10xf32, #tpu.memory_space<vmem>>, vector<2x10xf32>
    tpu.vector_store %arg7[%c0_74, %c0_75], %267 {strides = array<i32>} : memref<2x10xf32, #tpu.memory_space<vmem>>, vector<2x10xf32>,
    return
  }
  func.func @transform_0(%arg0: i32) -> (i32, i32) {
    %c0_i32 = arith.constant 0 : i32
    %c0_i32_0 = arith.constant 0 : i32
    %c0_i32_1 = arith.constant 0 : i32
    return %c0_i32, %c0_i32_0 : i32, i32
  }
  func.func @transform_1(%arg0: i32) -> (i32, i32, i32) {
    %c0_i32 = arith.constant 0 : i32
    %c0_i32_0 = arith.constant 0 : i32
    %c0_i32_1 = arith.constant 0 : i32
    %c0_i32_2 = arith.constant 0 : i32
    return %c0_i32, %c0_i32_0, %c0_i32_1 : i32, i32, i32
  }
  func.func @transform_2(%arg0: i32) -> (i32, i32, i32) {
    %c0_i32 = arith.constant 0 : i32
    %c0_i32_0 = arith.constant 0 : i32
    %c0_i32_1 = arith.constant 0 : i32
    %c0_i32_2 = arith.constant 0 : i32
    return %c0_i32, %c0_i32_0, %c0_i32_1 : i32, i32, i32
  }
  func.func @transform_3(%arg0: i32) -> (i32, i32, i32) {
    %c0_i32 = arith.constant 0 : i32
    %c0_i32_0 = arith.constant 0 : i32
    %c0_i32_1 = arith.constant 0 : i32
    %c0_i32_2 = arith.constant 0 : i32
    return %c0_i32, %c0_i32_0, %c0_i32_1 : i32, i32, i32
  }
  func.func @transform_4(%arg0: i32) -> (i32, i32) {
    %c0_i32 = arith.constant 0 : i32
    %c0_i32_0 = arith.constant 0 : i32
    %c0_i32_1 = arith.constant 0 : i32
    return %c0_i32, %c0_i32_0 : i32, i32
  }
  func.func @transform_5(%arg0: i32) -> (i32, i32) {
    %c0_i32 = arith.constant 0 : i32
    %c0_i32_0 = arith.constant 0 : i32
    %c0_i32_1 = arith.constant 0 : i32
    return %c0_i32, %c0_i32_0 : i32, i32
  }
  func.func @transform_6(%arg0: i32) -> (i32, i32) {
    %c0_i32 = arith.constant 0 : i32
    %c0_i32_0 = arith.constant 0 : i32
    %c0_i32_1 = arith.constant 0 : i32
    return %c0_i32, %c0_i32_0 : i32, i32
  }
}

</mosaic_0001>

<llo_original>
// kernel: tpu_custom_call.1
$region0: #{tpu_custom_call.1}
  #allocation0 [shape = 'u32[]', space=smem, size = 0x4, offset = 0x4, fixed_abs, tag = 'smem constant byte address 0x4 - core index']
  #allocation1 [shape = 'u32[144,128]{1,0:T(1,128)}', space=vmem, size = 0x12000, scoped, tag = 'internal scratch']
  %s0 = inlined_call_operand.vmem [shape: f32[16,28], index: 0, kind: input, shape index: {}]
  %s1 = inlined_call_operand.hbm [shape: f32[3,28,32], index: 1, kind: input, shape index: {}]
  %s2 = inlined_call_operand.hbm [shape: f32[3,32,32], index: 2, kind: input, shape index: {}]
  %s3 = inlined_call_operand.vmem [shape: f32[3,1,32], index: 3, kind: input, shape index: {}]
  %s4 = inlined_call_operand.vmem [shape: f32[32,10], index: 4, kind: input, shape index: {}]
  %s5 = inlined_call_operand.vmem [shape: f32[1,10], index: 5, kind: input, shape index: {}]
  %s6 = inlined_call_operand.hbm [shape: f32[2,10], index: 6, kind: output, shape index: {}]
  %s7 = sld [smem:[#allocation0]]
  $region42: #{tpu_custom_call.1} parent=0
    _
  %s9 = ssub.s32 1, %s7
  %s10 = scalar_select 0, %s9, %s7
  $region1: #{tpu_custom_call.1} parent=0
    #allocation2 [shape = 'u8[49152]{0}', space=vmem, size = 0xc000, scoped, tag = 'input window, operand 1, single buffered']
    #allocation3 [shape = 's32[1]{0}', space=sflag, size = 0x4, scoped, tag = 'scoped memory for tpu_custom_call.1']
    #allocation4 [shape = 's32[1]{0}', space=sflag, size = 0x4, scoped, tag = 'scoped memory for tpu_custom_call.1']
    #allocation5 [shape = 'u8[49152]{0}', space=vmem, size = 0xc000, scoped, tag = 'input window, operand 2, single buffered']
    #allocation6 [shape = 's32[1]{0}', space=sflag, size = 0x4, scoped, tag = 'scoped memory for tpu_custom_call.1']
    #allocation7 [shape = 'u8[1024]{0}', space=vmem, size = 0x400, scoped, tag = 'output window, operand 0, single buffered']
    %11 = vsyncpa [#allocation3], 0
    %12 = vsyncpa [#allocation6], 0
    %13 = vsyncpa [#allocation4], 0
    // Predicated region
    $region2: #{tpu_custom_call.1} parent=1 // pred_check
      _
    $region3: #{tpu_custom_call.1} parent=1 // pred_check_branch
      %15 = sbr.rel (0) target = $region5
    $region4: #{tpu_custom_call.1} parent=1 // pred_region
      _
    $region5: #{tpu_custom_call.1} parent=1 // pred_fallthru
      _
    // Predicated region
    $region6: #{tpu_custom_call.1} parent=1 // pred_check
      _
    $region7: #{tpu_custom_call.1} parent=1 // pred_check_branch
      %17 = sbr.rel (0) target = $region9
    $region8: #{tpu_custom_call.1} parent=1 // pred_region
      %s19 = ssub.s32 1536, 1536
      %20 = vsyncadd [#allocation3], %s19
      %s21 = sshll.u32 [#allocation2], 4
      %s22 = int_to_ptr.vmem [resolvable:$true] %s21
      %27 = dma.hbm_to_vmem [thread:$0]  %s1, 1536, %s22, [#allocation3], 128, 128, 8
    $region9: #{tpu_custom_call.1} parent=1 // pred_fallthru
      _
    // Predicated region
    $region10: #{tpu_custom_call.1} parent=1 // pred_check
      _
    $region11: #{tpu_custom_call.1} parent=1 // pred_check_branch
      %29 = sbr.rel (0) target = $region13
    $region12: #{tpu_custom_call.1} parent=1 // pred_region
      %s31 = ssub.s32 1536, 1536
      %32 = vsyncadd [#allocation6], %s31
      %s33 = sshll.u32 [#allocation5], 4
      %s34 = int_to_ptr.vmem [resolvable:$true] %s33
      %39 = dma.hbm_to_vmem [thread:$0]  %s2, 1536, %s34, [#allocation6], 128, 128, 8
    $region13: #{tpu_custom_call.1} parent=1 // pred_fallthru
      _
    // Predicated region
    $region14: #{tpu_custom_call.1} parent=1 // pred_check
      _
    $region15: #{tpu_custom_call.1} parent=1 // pred_check_branch
      %41 = sbr.rel (0) target = $region17
    $region16: #{tpu_custom_call.1} parent=1 // pred_region
      _
    $region17: #{tpu_custom_call.1} parent=1 // pred_fallthru
      _
    // Predicated region
    $region18: #{tpu_custom_call.1} parent=1 // pred_check
      _
    $region19: #{tpu_custom_call.1} parent=1 // pred_check_branch
      %43 = sbr.rel (0) target = $region21
    $region20: #{tpu_custom_call.1} parent=1 // pred_region
      _
    $region21: #{tpu_custom_call.1} parent=1 // pred_fallthru
      _
    // Predicated region
    $region22: #{tpu_custom_call.1} parent=1 // pred_check
      _
    $region23: #{tpu_custom_call.1} parent=1 // pred_check_branch
      %45 = sbr.rel (0) target = $region25
    $region24: #{tpu_custom_call.1} parent=1 // pred_region
      _
    $region25: #{tpu_custom_call.1} parent=1 // pred_fallthru
      _
    // Predicated region
    $region26: #{tpu_custom_call.1} parent=1 // pred_check
      _
    $region27: #{tpu_custom_call.1} parent=1 // pred_check_branch
      %47 = sbr.rel (0) target = $region29
    $region28: #{tpu_custom_call.1} parent=1 // pred_region
      %48 = dma.done [#allocation3], 1536
    $region29: #{tpu_custom_call.1} parent=1 // pred_fallthru
      _
    // Predicated region
    $region30: #{tpu_custom_call.1} parent=1 // pred_check
      _
    $region31: #{tpu_custom_call.1} parent=1 // pred_check_branch
      %50 = sbr.rel (0) target = $region33
    $region32: #{tpu_custom_call.1} parent=1 // pred_region
      %51 = dma.done [#allocation6], 1536
    $region33: #{tpu_custom_call.1} parent=1 // pred_fallthru
      _
    %v52 = vld [vmem:[%s0] sm:$0xff]
    %v53 = vld [vmem:[%s0 + $0x8] sm:$0xff]
    %v54 = vld [vmem:[#allocation2] sm:$0xff]
    %v55 = vld [vmem:[#allocation2 + $0x8] sm:$0xff]
    %v56 = vld [vmem:[#allocation2 + $0x10] sm:$0xff]
    %v57 = vld [vmem:[#allocation2 + $0x18] sm:$0xf]
    %vm58 = vcmask 228352
    %v60 = vsel %vm58, %v52, 0
    %v63 = vsel %vm58, %v53, 0
    %vm65 = vcmask 1043456
    %v67 = vsel %vm65, %v57, 0
    %69 = vmatprep.subr.mxu0 0.0
    %70 = vmatpush1.msra.mxu0 %v54
    %71 = vmatprep.subr.mxu0 0.0
    %72 = vmatpush1.msra.mxu0 %v55
    %73 = vmatprep.subr.mxu0 0.0
    %74 = vmatpush1.msra.mxu0 %v56
    %75 = vmatprep.subr.mxu0 0.0
    %76 = vmatpush1.msra.mxu0 %v67
    %77 = vmatprep.subr.mxu0 0.0
    %78 = vmatpush1.msra.mxu0 0.0
    %79 = vmatprep.subr.mxu0 0.0
    %80 = vmatpush1.msra.mxu0 0.0
    %81 = vmatprep.subr.mxu0 0.0
    %82 = vmatpush1.msra.mxu0 0.0
    %83 = vmatprep.subr.mxu0 0.0
    %84 = vmatpush1.msra.mxu0 0.0
    %85 = vmatprep.subr.mxu0 0.0
    %86 = vmatpush1.msra.mxu0 0.0
    %87 = vmatprep.subr.mxu0 0.0
    %88 = vmatpush1.msra.mxu0 0.0
    %89 = vmatprep.subr.mxu0 0.0
    %90 = vmatpush1.msra.mxu0 0.0
    %91 = vmatprep.subr.mxu0 0.0
    %92 = vmatpush1.msra.mxu0 0.0
    %93 = vmatprep.subr.mxu0 0.0
    %94 = vmatpush1.msra.mxu0 0.0
    %95 = vmatprep.subr.mxu0 0.0
    %96 = vmatpush1.msra.mxu0 0.0
    %97 = vmatprep.subr.mxu0 0.0
    %98 = vmatpush1.msra.mxu0 0.0
    %99 = vmatprep.subr.mxu0 0.0
    %100 = vmatpush1.msra.mxu0 0.0
    %101 = vmatprep.subr.mxu0 0.0
    %102 = vmatpush1.msra.mxu0 0.0
    %103 = vmatprep.subr.mxu0 0.0
    %104 = vmatpush1.msra.mxu0 0.0
    %105 = vmatprep.subr.mxu0 0.0
    %106 = vmatpush1.msra.mxu0 0.0
    %107 = vmatprep.subr.mxu0 0.0
    %108 = vmatpush1.msra.mxu0 0.0
    %109 = vmatprep.subr.mxu0 0.0
    %110 = vmatpush1.msra.mxu0 0.0
    %111 = vmatprep.subr.mxu0 0.0
    %112 = vmatpush1.msra.mxu0 0.0
    %113 = vmatprep.subr.mxu0 0.0
    %114 = vmatpush1.msra.mxu0 0.0
    %115 = vmatprep.subr.mxu0 0.0
    %116 = vmatpush1.msra.mxu0 0.0
    %117 = vmatprep.subr.mxu0 0.0
    %118 = vmatpush1.msra.mxu0 0.0
    %119 = vmatprep.subr.mxu0 0.0
    %120 = vmatpush1.msra.mxu0 0.0
    %121 = vmatprep.subr.mxu0 0.0
    %122 = vmatpush1.msra.mxu0 0.0
    %123 = vmatprep.subr.mxu0 0.0
    %124 = vmatpush1.msra.mxu0 0.0
    %125 = vmatprep.subr.mxu0 0.0
    %126 = vmatpush1.msra.mxu0 0.0
    %127 = vmatprep.subr.mxu0 0.0
    %128 = vmatpush1.msra.mxu0 0.0
    %129 = vmatprep.subr.mxu0 0.0
    %130 = vmatpush1.msra.mxu0 0.0
    %131 = vmatprep.subr.mxu0 0.0
    %132 = vmatpush1.msra.mxu0 0.0
    %133 = vmatprep.mubr.f32.mxu0 0.0
    %134 = vmatmul.mubr.f32.gmra.mrb[0].mxu0 %v60
    %v135 = vpop.f32.mrb[0].mxu0
    %v136 = vadd.f32 0.0, %v135
    %v137 = vpop.f32.mrb[0].mxu0
    %138 = vmatprep.mubr.f32.mxu0 0.0
    %139 = vmatmul.mubr.f32.gmra.mrb[0].mxu0 %v63
    %v140 = vpop.f32.mrb[0].mxu0
    %v141 = vadd.f32 0.0, %v140
    %v142 = vpop.f32.mrb[0].mxu0
    %143 = vdwg.mxu0
    %s144 = scalar_lea.vmem [#allocation2], 32
    %v145 = vld [vmem:[%s144] sm:$0xff]
    %v146 = vld [vmem:[%s144 + $0x8] sm:$0xff]
    %v147 = vld [vmem:[%s144 + $0x10] sm:$0xff]
    %v148 = vld [vmem:[%s144 + $0x18] sm:$0xf]
    %v150 = vsel %vm65, %v148, 0
    %152 = vmatprep.subr.mxu0 0.0
    %153 = vmatpush1.msra.mxu0 %v145
    %154 = vmatprep.subr.mxu0 0.0
    %155 = vmatpush1.msra.mxu0 %v146
    %156 = vmatprep.subr.mxu0 0.0
    %157 = vmatpush1.msra.mxu0 %v147
    %158 = vmatprep.subr.mxu0 0.0
    %159 = vmatpush1.msra.mxu0 %v150
    %160 = vmatprep.subr.mxu0 0.0
    %161 = vmatpush1.msra.mxu0 0.0
    %162 = vmatprep.subr.mxu0 0.0
    %163 = vmatpush1.msra.mxu0 0.0
    %164 = vmatprep.subr.mxu0 0.0
    %165 = vmatpush1.msra.mxu0 0.0
    %166 = vmatprep.subr.mxu0 0.0
    %167 = vmatpush1.msra.mxu0 0.0
    %168 = vmatprep.subr.mxu0 0.0
    %169 = vmatpush1.msra.mxu0 0.0
    %170 = vmatprep.subr.mxu0 0.0
    %171 = vmatpush1.msra.mxu0 0.0
    %172 = vmatprep.subr.mxu0 0.0
    %173 = vmatpush1.msra.mxu0 0.0
    %174 = vmatprep.subr.mxu0 0.0
    %175 = vmatpush1.msra.mxu0 0.0
    %176 = vmatprep.subr.mxu0 0.0
    %177 = vmatpush1.msra.mxu0 0.0
    %178 = vmatprep.subr.mxu0 0.0
    %179 = vmatpush1.msra.mxu0 0.0
    %180 = vmatprep.subr.mxu0 0.0
    %181 = vmatpush1.msra.mxu0 0.0
    %182 = vmatprep.subr.mxu0 0.0
    %183 = vmatpush1.msra.mxu0 0.0
    %184 = vmatprep.subr.mxu0 0.0
    %185 = vmatpush1.msra.mxu0 0.0
    %186 = vmatprep.subr.mxu0 0.0
    %187 = vmatpush1.msra.mxu0 0.0
    %188 = vmatprep.subr.mxu0 0.0
    %189 = vmatpush1.msra.mxu0 0.0
    %190 = vmatprep.subr.mxu0 0.0
    %191 = vmatpush1.msra.mxu0 0.0
    %192 = vmatprep.subr.mxu0 0.0
    %193 = vmatpush1.msra.mxu0 0.0
    %194 = vmatprep.subr.mxu0 0.0
    %195 = vmatpush1.msra.mxu0 0.0
    %196 = vmatprep.subr.mxu0 0.0
    %197 = vmatpush1.msra.mxu0 0.0
    %198 = vmatprep.subr.mxu0 0.0
    %199 = vmatpush1.msra.mxu0 0.0
    %200 = vmatprep.subr.mxu0 0.0
    %201 = vmatpush1.msra.mxu0 0.0
    %202 = vmatprep.subr.mxu0 0.0
    %203 = vmatpush1.msra.mxu0 0.0
    %204 = vmatprep.subr.mxu0 0.0
    %205 = vmatpush1.msra.mxu0 0.0
    %206 = vmatprep.subr.mxu0 0.0
    %207 = vmatpush1.msra.mxu0 0.0
    %208 = vmatprep.subr.mxu0 0.0
    %209 = vmatpush1.msra.mxu0 0.0
    %210 = vmatprep.subr.mxu0 0.0
    %211 = vmatpush1.msra.mxu0 0.0
    %212 = vmatprep.subr.mxu0 0.0
    %213 = vmatpush1.msra.mxu0 0.0
    %214 = vmatprep.subr.mxu0 0.0
    %215 = vmatpush1.msra.mxu0 0.0
    %216 = vmatprep.mubr.f32.mxu0 0.0
    %217 = vmatmul.mubr.f32.gmra.mrb[0].mxu0 %v60
    %v218 = vpop.f32.mrb[0].mxu0
    %v219 = vadd.f32 0.0, %v218
    %v220 = vpop.f32.mrb[0].mxu0
    %221 = vmatprep.mubr.f32.mxu0 0.0
    %222 = vmatmul.mubr.f32.gmra.mrb[0].mxu0 %v63
    %v223 = vpop.f32.mrb[0].mxu0
    %v224 = vadd.f32 0.0, %v223
    %v225 = vpop.f32.mrb[0].mxu0
    %226 = vdwg.mxu0
    %s227 = scalar_lea.vmem [#allocation2], 64
    %v228 = vld [vmem:[%s227] sm:$0xff]
    %v229 = vld [vmem:[%s227 + $0x8] sm:$0xff]
    %v230 = vld [vmem:[%s227 + $0x10] sm:$0xff]
    %v231 = vld [vmem:[%s227 + $0x18] sm:$0xf]
    %v233 = vsel %vm65, %v231, 0
    %235 = vmatprep.subr.mxu0 0.0
    %236 = vmatpush1.msra.mxu0 %v228
    %237 = vmatprep.subr.mxu0 0.0
    %238 = vmatpush1.msra.mxu0 %v229
    %239 = vmatprep.subr.mxu0 0.0
    %240 = vmatpush1.msra.mxu0 %v230
    %241 = vmatprep.subr.mxu0 0.0
    %242 = vmatpush1.msra.mxu0 %v233
    %243 = vmatprep.subr.mxu0 0.0
    %244 = vmatpush1.msra.mxu0 0.0
    %245 = vmatprep.subr.mxu0 0.0
    %246 = vmatpush1.msra.mxu0 0.0
    %247 = vmatprep.subr.mxu0 0.0
    %248 = vmatpush1.msra.mxu0 0.0
    %249 = vmatprep.subr.mxu0 0.0
    %250 = vmatpush1.msra.mxu0 0.0
    %251 = vmatprep.subr.mxu0 0.0
    %252 = vmatpush1.msra.mxu0 0.0
    %253 = vmatprep.subr.mxu0 0.0
    %254 = vmatpush1.msra.mxu0 0.0
    %255 = vmatprep.subr.mxu0 0.0
    %256 = vmatpush1.msra.mxu0 0.0
    %257 = vmatprep.subr.mxu0 0.0
    %258 = vmatpush1.msra.mxu0 0.0
    %259 = vmatprep.subr.mxu0 0.0
    %260 = vmatpush1.msra.mxu0 0.0
    %261 = vmatprep.subr.mxu0 0.0
    %262 = vmatpush1.msra.mxu0 0.0
    %263 = vmatprep.subr.mxu0 0.0
    %264 = vmatpush1.msra.mxu0 0.0
    %265 = vmatprep.subr.mxu0 0.0
    %266 = vmatpush1.msra.mxu0 0.0
    %267 = vmatprep.subr.mxu0 0.0
    %268 = vmatpush1.msra.mxu0 0.0
    %269 = vmatprep.subr.mxu0 0.0
    %270 = vmatpush1.msra.mxu0 0.0
    %271 = vmatprep.subr.mxu0 0.0
    %272 = vmatpush1.msra.mxu0 0.0
    %273 = vmatprep.subr.mxu0 0.0
    %274 = vmatpush1.msra.mxu0 0.0
    %275 = vmatprep.subr.mxu0 0.0
    %276 = vmatpush1.msra.mxu0 0.0
    %277 = vmatprep.subr.mxu0 0.0
    %278 = vmatpush1.msra.mxu0 0.0
    %279 = vmatprep.subr.mxu0 0.0
    %280 = vmatpush1.msra.mxu0 0.0
    %281 = vmatprep.subr.mxu0 0.0
    %282 = vmatpush1.msra.mxu0 0.0
    %283 = vmatprep.subr.mxu0 0.0
    %284 = vmatpush1.msra.mxu0 0.0
    %285 = vmatprep.subr.mxu0 0.0
    %286 = vmatpush1.msra.mxu0 0.0
    %287 = vmatprep.subr.mxu0 0.0
    %288 = vmatpush1.msra.mxu0 0.0
    %289 = vmatprep.subr.mxu0 0.0
    %290 = vmatpush1.msra.mxu0 0.0
    %291 = vmatprep.subr.mxu0 0.0
    %292 = vmatpush1.msra.mxu0 0.0
    %293 = vmatprep.subr.mxu0 0.0
    %294 = vmatpush1.msra.mxu0 0.0
    %295 = vmatprep.subr.mxu0 0.0
    %296 = vmatpush1.msra.mxu0 0.0
    %297 = vmatprep.subr.mxu0 0.0
    %298 = vmatpush1.msra.mxu0 0.0
    %299 = vmatprep.mubr.f32.mxu0 0.0
    %300 = vmatmul.mubr.f32.gmra.mrb[0].mxu0 %v60
    %v301 = vpop.f32.mrb[0].mxu0
    %v302 = vadd.f32 0.0, %v301
    %v303 = vpop.f32.mrb[0].mxu0
    %304 = vmatprep.mubr.f32.mxu0 0.0
    %305 = vmatmul.mubr.f32.gmra.mrb[0].mxu0 %v63
    %v306 = vpop.f32.mrb[0].mxu0
    %v307 = vadd.f32 0.0, %v306
    %v308 = vpop.f32.mrb[0].mxu0
    %309 = vdwg.mxu0
    %v310 = vld [vmem:[#allocation5] sm:$0xff]
    %v311 = vld [vmem:[#allocation5 + $0x8] sm:$0xff]
    %v312 = vld [vmem:[#allocation5 + $0x10] sm:$0xff]
    %v313 = vld [vmem:[#allocation5 + $0x18] sm:$0xff]
    %s314 = scalar_lea.vmem [#allocation5], 32
    %v315 = vld [vmem:[%s314] sm:$0xff]
    %v316 = vld [vmem:[%s314 + $0x8] sm:$0xff]
    %v317 = vld [vmem:[%s314 + $0x10] sm:$0xff]
    %v318 = vld [vmem:[%s314 + $0x18] sm:$0xff]
    %s319 = scalar_lea.vmem [#allocation5], 64
    %v320 = vld [vmem:[%s319] sm:$0xff]
    %v321 = vld [vmem:[%s319 + $0x8] sm:$0xff]
    %v322 = vld [vmem:[%s319 + $0x10] sm:$0xff]
    %v323 = vld [vmem:[%s319 + $0x18] sm:$0xff]
    %v324 = vld [vmem:[%s3] sm:$0x1]
    %s325 = scalar_lea.vmem %s3, 1
    %v326 = vld [vmem:[%s325] sm:$0x1]
    %s327 = scalar_lea.vmem %s3, 2
    %v328 = vld [vmem:[%s327] sm:$0x1]
    %vm329 = vcmask 261120
    %v331 = vsel %vm329, 0.0, 0
    %333 = vmatprep.subr.mxu0 0.0
    %334 = vmatpush1.msra.mxu0 %v310
    %335 = vmatprep.subr.mxu0 0.0
    %336 = vmatpush1.msra.mxu0 %v311
    %337 = vmatprep.subr.mxu0 0.0
    %338 = vmatpush1.msra.mxu0 %v312
    %339 = vmatprep.subr.mxu0 0.0
    %340 = vmatpush1.msra.mxu0 %v313
    %341 = vmatprep.subr.mxu0 0.0
    %342 = vmatpush1.msra.mxu0 0.0
    %343 = vmatprep.subr.mxu0 0.0
    %344 = vmatpush1.msra.mxu0 0.0
    %345 = vmatprep.subr.mxu0 0.0
    %346 = vmatpush1.msra.mxu0 0.0
    %347 = vmatprep.subr.mxu0 0.0
    %348 = vmatpush1.msra.mxu0 0.0
    %349 = vmatprep.subr.mxu0 0.0
    %350 = vmatpush1.msra.mxu0 0.0
    %351 = vmatprep.subr.mxu0 0.0
    %352 = vmatpush1.msra.mxu0 0.0
    %353 = vmatprep.subr.mxu0 0.0
    %354 = vmatpush1.msra.mxu0 0.0
    %355 = vmatprep.subr.mxu0 0.0
    %356 = vmatpush1.msra.mxu0 0.0
    %357 = vmatprep.subr.mxu0 0.0
    %358 = vmatpush1.msra.mxu0 0.0
    %359 = vmatprep.subr.mxu0 0.0
    %360 = vmatpush1.msra.mxu0 0.0
    %361 = vmatprep.subr.mxu0 0.0
    %362 = vmatpush1.msra.mxu0 0.0
    %363 = vmatprep.subr.mxu0 0.0
    %364 = vmatpush1.msra.mxu0 0.0
    %365 = vmatprep.subr.mxu0 0.0
    %366 = vmatpush1.msra.mxu0 0.0
    %367 = vmatprep.subr.mxu0 0.0
    %368 = vmatpush1.msra.mxu0 0.0
    %369 = vmatprep.subr.mxu0 0.0
    %370 = vmatpush1.msra.mxu0 0.0
    %371 = vmatprep.subr.mxu0 0.0
    %372 = vmatpush1.msra.mxu0 0.0
    %373 = vmatprep.subr.mxu0 0.0
    %374 = vmatpush1.msra.mxu0 0.0
    %375 = vmatprep.subr.mxu0 0.0
    %376 = vmatpush1.msra.mxu0 0.0
    %377 = vmatprep.subr.mxu0 0.0
    %378 = vmatpush1.msra.mxu0 0.0
    %379 = vmatprep.subr.mxu0 0.0
    %380 = vmatpush1.msra.mxu0 0.0
    %381 = vmatprep.subr.mxu0 0.0
    %382 = vmatpush1.msra.mxu0 0.0
    %383 = vmatprep.subr.mxu0 0.0
    %384 = vmatpush1.msra.mxu0 0.0
    %385 = vmatprep.subr.mxu0 0.0
    %386 = vmatpush1.msra.mxu0 0.0
    %387 = vmatprep.subr.mxu0 0.0
    %388 = vmatpush1.msra.mxu0 0.0
    %389 = vmatprep.subr.mxu0 0.0
    %390 = vmatpush1.msra.mxu0 0.0
    %391 = vmatprep.subr.mxu0 0.0
    %392 = vmatpush1.msra.mxu0 0.0
    %393 = vmatprep.subr.mxu0 0.0
    %394 = vmatpush1.msra.mxu0 0.0
    %395 = vmatprep.subr.mxu0 0.0
    %396 = vmatpush1.msra.mxu0 0.0
    %397 = vmatprep.mubr.f32.mxu0 0.0
    %398 = vmatmul.mubr.f32.gmra.mrb[0].mxu0 %v331
    %v399 = vpop.f32.mrb[0].mxu0
    %v400 = vadd.f32 0.0, %v399
    %v401 = vpop.f32.mrb[0].mxu0
    %402 = vdwg.mxu0
    %403 = vmatprep.subr.mxu0 0.0
    %404 = vmatpush1.msra.mxu0 %v315
    %405 = vmatprep.subr.mxu0 0.0
    %406 = vmatpush1.msra.mxu0 %v316
    %407 = vmatprep.subr.mxu0 0.0
    %408 = vmatpush1.msra.mxu0 %v317
    %409 = vmatprep.subr.mxu0 0.0
    %410 = vmatpush1.msra.mxu0 %v318
    %411 = vmatprep.subr.mxu0 0.0
    %412 = vmatpush1.msra.mxu0 0.0
    %413 = vmatprep.subr.mxu0 0.0
    %414 = vmatpush1.msra.mxu0 0.0
    %415 = vmatprep.subr.mxu0 0.0
    %416 = vmatpush1.msra.mxu0 0.0
    %417 = vmatprep.subr.mxu0 0.0
    %418 = vmatpush1.msra.mxu0 0.0
    %419 = vmatprep.subr.mxu0 0.0
    %420 = vmatpush1.msra.mxu0 0.0
    %421 = vmatprep.subr.mxu0 0.0
    %422 = vmatpush1.msra.mxu0 0.0
    %423 = vmatprep.subr.mxu0 0.0
    %424 = vmatpush1.msra.mxu0 0.0
    %425 = vmatprep.subr.mxu0 0.0
    %426 = vmatpush1.msra.mxu0 0.0
    %427 = vmatprep.subr.mxu0 0.0
    %428 = vmatpush1.msra.mxu0 0.0
    %429 = vmatprep.subr.mxu0 0.0
    %430 = vmatpush1.msra.mxu0 0.0
    %431 = vmatprep.subr.mxu0 0.0
    %432 = vmatpush1.msra.mxu0 0.0
    %433 = vmatprep.subr.mxu0 0.0
    %434 = vmatpush1.msra.mxu0 0.0
    %435 = vmatprep.subr.mxu0 0.0
    %436 = vmatpush1.msra.mxu0 0.0
    %437 = vmatprep.subr.mxu0 0.0
    %438 = vmatpush1.msra.mxu0 0.0
    %439 = vmatprep.subr.mxu0 0.0
    %440 = vmatpush1.msra.mxu0 0.0
    %441 = vmatprep.subr.mxu0 0.0
    %442 = vmatpush1.msra.mxu0 0.0
    %443 = vmatprep.subr.mxu0 0.0
    %444 = vmatpush1.msra.mxu0 0.0
    %445 = vmatprep.subr.mxu0 0.0
    %446 = vmatpush1.msra.mxu0 0.0
    %447 = vmatprep.subr.mxu0 0.0
    %448 = vmatpush1.msra.mxu0 0.0
    %449 = vmatprep.subr.mxu0 0.0
    %450 = vmatpush1.msra.mxu0 0.0
    %451 = vmatprep.subr.mxu0 0.0
    %452 = vmatpush1.msra.mxu0 0.0
    %453 = vmatprep.subr.mxu0 0.0
    %454 = vmatpush1.msra.mxu0 0.0
    %455 = vmatprep.subr.mxu0 0.0
    %456 = vmatpush1.msra.mxu0 0.0
    %457 = vmatprep.subr.mxu0 0.0
    %458 = vmatpush1.msra.mxu0 0.0
    %459 = vmatprep.subr.mxu0 0.0
    %460 = vmatpush1.msra.mxu0 0.0
    %461 = vmatprep.subr.mxu0 0.0
    %462 = vmatpush1.msra.mxu0 0.0
    %463 = vmatprep.subr.mxu0 0.0
    %464 = vmatpush1.msra.mxu0 0.0
    %465 = vmatprep.subr.mxu0 0.0
    %466 = vmatpush1.msra.mxu0 0.0
    %467 = vmatprep.mubr.f32.mxu0 0.0
    %468 = vmatmul.mubr.f32.gmra.mrb[0].mxu0 %v331
    %v469 = vpop.f32.mrb[0].mxu0
    %v470 = vadd.f32 0.0, %v469
    %v471 = vpop.f32.mrb[0].mxu0
    %472 = vdwg.mxu0
    %473 = vmatprep.subr.mxu0 0.0
    %474 = vmatpush1.msra.mxu0 %v320
    %475 = vmatprep.subr.mxu0 0.0
    %476 = vmatpush1.msra.mxu0 %v321
    %477 = vmatprep.subr.mxu0 0.0
    %478 = vmatpush1.msra.mxu0 %v322
    %479 = vmatprep.subr.mxu0 0.0
    %480 = vmatpush1.msra.mxu0 %v323
    %481 = vmatprep.subr.mxu0 0.0
    %482 = vmatpush1.msra.mxu0 0.0
    %483 = vmatprep.subr.mxu0 0.0
    %484 = vmatpush1.msra.mxu0 0.0
    %485 = vmatprep.subr.mxu0 0.0
    %486 = vmatpush1.msra.mxu0 0.0
    %487 = vmatprep.subr.mxu0 0.0
    %488 = vmatpush1.msra.mxu0 0.0
    %489 = vmatprep.subr.mxu0 0.0
    %490 = vmatpush1.msra.mxu0 0.0
    %491 = vmatprep.subr.mxu0 0.0
    %492 = vmatpush1.msra.mxu0 0.0
    %493 = vmatprep.subr.mxu0 0.0
    %494 = vmatpush1.msra.mxu0 0.0
    %495 = vmatprep.subr.mxu0 0.0
    %496 = vmatpush1.msra.mxu0 0.0
    %497 = vmatprep.subr.mxu0 0.0
    %498 = vmatpush1.msra.mxu0 0.0
    %499 = vmatprep.subr.mxu0 0.0
    %500 = vmatpush1.msra.mxu0 0.0
    %501 = vmatprep.subr.mxu0 0.0
    %502 = vmatpush1.msra.mxu0 0.0
    %503 = vmatprep.subr.mxu0 0.0
    %504 = vmatpush1.msra.mxu0 0.0
    %505 = vmatprep.subr.mxu0 0.0
    %506 = vmatpush1.msra.mxu0 0.0
    %507 = vmatprep.subr.mxu0 0.0
    %508 = vmatpush1.msra.mxu0 0.0
    %509 = vmatprep.subr.mxu0 0.0
    %510 = vmatpush1.msra.mxu0 0.0
    %511 = vmatprep.subr.mxu0 0.0
    %512 = vmatpush1.msra.mxu0 0.0
    %513 = vmatprep.subr.mxu0 0.0
    %514 = vmatpush1.msra.mxu0 0.0
    %515 = vmatprep.subr.mxu0 0.0
    %516 = vmatpush1.msra.mxu0 0.0
    %517 = vmatprep.subr.mxu0 0.0
    %518 = vmatpush1.msra.mxu0 0.0
    %519 = vmatprep.subr.mxu0 0.0
    %520 = vmatpush1.msra.mxu0 0.0
    %521 = vmatprep.subr.mxu0 0.0
    %522 = vmatpush1.msra.mxu0 0.0
    %523 = vmatprep.subr.mxu0 0.0
    %524 = vmatpush1.msra.mxu0 0.0
    %525 = vmatprep.subr.mxu0 0.0
    %526 = vmatpush1.msra.mxu0 0.0
    %527 = vmatprep.subr.mxu0 0.0
    %528 = vmatpush1.msra.mxu0 0.0
    %529 = vmatprep.subr.mxu0 0.0
    %530 = vmatpush1.msra.mxu0 0.0
    %531 = vmatprep.subr.mxu0 0.0
    %532 = vmatpush1.msra.mxu0 0.0
    %533 = vmatprep.subr.mxu0 0.0
    %534 = vmatpush1.msra.mxu0 0.0
    %535 = vmatprep.subr.mxu0 0.0
    %536 = vmatpush1.msra.mxu0 0.0
    %537 = vmatprep.mubr.f32.mxu0 0.0
    %538 = vmatmul.mubr.f32.gmra.mrb[0].mxu0 %v331
    %v539 = vpop.f32.mrb[0].mxu0
    %v540 = vadd.f32 0.0, %v539
    %v541 = vpop.f32.mrb[0].mxu0
    %542 = vdwg.mxu0
    %v543 = vadd.f32 %v136, %v400
    %v545 = vlaneseq
    %v546 = vshrl.u32 %v545, 7
    %v547 = vsub.s32 0, %v546
    %v548 = vrot.slane %v324, %v547
    %v550 = vadd.f32 %v543, %v548
    %v551 = vxor.u32 %v550, 2147483648
    %v552 = vmul.f32 %v551, 1.442695
    %v553 = vpow.pop %v552
    %v554 = vadd.f32 %v553, 1.0
    %v555 = vrcp.pop %v554
    %v556 = vmul.f32 1.0, %v555
    %v557 = vadd.f32 %v219, %v470
    %v559 = vlaneseq
    %v560 = vshrl.u32 %v559, 7
    %v561 = vsub.s32 0, %v560
    %v562 = vrot.slane %v326, %v561
    %v564 = vadd.f32 %v557, %v562
    %v565 = vxor.u32 %v564, 2147483648
    %v566 = vmul.f32 %v565, 1.442695
    %v567 = vpow.pop %v566
    %v568 = vadd.f32 %v567, 1.0
    %v569 = vrcp.pop %v568
    %v570 = vmul.f32 1.0, %v569
    %v571 = vmul.f32 %v556, %v540
    %v572 = vadd.f32 %v302, %v571
    %v574 = vlaneseq
    %v575 = vshrl.u32 %v574, 7
    %v576 = vsub.s32 0, %v575
    %v577 = vrot.slane %v328, %v576
    %v579 = vadd.f32 %v572, %v577
    %v580 = vtanh.pop %v579
    %v581 = vsub.f32 0.0, %v580
    %v582 = vmul.f32 %v570, %v581
    %v583 = vadd.f32 %v580, %v582
    %v585 = vsel %vm329, %v583, 0
    %587 = vmatprep.subr.mxu0 0.0
    %588 = vmatpush1.msra.mxu0 %v310
    %589 = vmatprep.subr.mxu0 0.0
    %590 = vmatpush1.msra.mxu0 %v311
    %591 = vmatprep.subr.mxu0 0.0
    %592 = vmatpush1.msra.mxu0 %v312
    %593 = vmatprep.subr.mxu0 0.0
    %594 = vmatpush1.msra.mxu0 %v313
    %595 = vmatprep.subr.mxu0 0.0
    %596 = vmatpush1.msra.mxu0 0.0
    %597 = vmatprep.subr.mxu0 0.0
    %598 = vmatpush1.msra.mxu0 0.0
    %599 = vmatprep.subr.mxu0 0.0
    %600 = vmatpush1.msra.mxu0 0.0
    %601 = vmatprep.subr.mxu0 0.0
    %602 = vmatpush1.msra.mxu0 0.0
    %603 = vmatprep.subr.mxu0 0.0
    %604 = vmatpush1.msra.mxu0 0.0
    %605 = vmatprep.subr.mxu0 0.0
    %606 = vmatpush1.msra.mxu0 0.0
    %607 = vmatprep.subr.mxu0 0.0
    %608 = vmatpush1.msra.mxu0 0.0
    %609 = vmatprep.subr.mxu0 0.0
    %610 = vmatpush1.msra.mxu0 0.0
    %611 = vmatprep.subr.mxu0 0.0
    %612 = vmatpush1.msra.mxu0 0.0
    %613 = vmatprep.subr.mxu0 0.0
    %614 = vmatpush1.msra.mxu0 0.0
    %615 = vmatprep.subr.mxu0 0.0
    %616 = vmatpush1.msra.mxu0 0.0
    %617 = vmatprep.subr.mxu0 0.0
    %618 = vmatpush1.msra.mxu0 0.0
    %619 = vmatprep.subr.mxu0 0.0
    %620 = vmatpush1.msra.mxu0 0.0
    %621 = vmatprep.subr.mxu0 0.0
    %622 = vmatpush1.msra.mxu0 0.0
    %623 = vmatprep.subr.mxu0 0.0
    %624 = vmatpush1.msra.mxu0 0.0
    %625 = vmatprep.subr.mxu0 0.0
    %626 = vmatpush1.msra.mxu0 0.0
    %627 = vmatprep.subr.mxu0 0.0
    %628 = vmatpush1.msra.mxu0 0.0
    %629 = vmatprep.subr.mxu0 0.0
    %630 = vmatpush1.msra.mxu0 0.0
    %631 = vmatprep.subr.mxu0 0.0
    %632 = vmatpush1.msra.mxu0 0.0
    %633 = vmatprep.subr.mxu0 0.0
    %634 = vmatpush1.msra.mxu0 0.0
    %635 = vmatprep.subr.mxu0 0.0
    %636 = vmatpush1.msra.mxu0 0.0
    %637 = vmatprep.subr.mxu0 0.0
    %638 = vmatpush1.msra.mxu0 0.0
    %639 = vmatprep.subr.mxu0 0.0
    %640 = vmatpush1.msra.mxu0 0.0
    %641 = vmatprep.subr.mxu0 0.0
    %642 = vmatpush1.msra.mxu0 0.0
    %643 = vmatprep.subr.mxu0 0.0
    %644 = vmatpush1.msra.mxu0 0.0
    %645 = vmatprep.subr.mxu0 0.0
    %646 = vmatpush1.msra.mxu0 0.0
    %647 = vmatprep.subr.mxu0 0.0
    %648 = vmatpush1.msra.mxu0 0.0
    %649 = vmatprep.subr.mxu0 0.0
    %650 = vmatpush1.msra.mxu0 0.0
    %651 = vmatprep.mubr.f32.mxu0 0.0
    %652 = vmatmul.mubr.f32.gmra.mrb[0].mxu0 %v585
    %v653 = vpop.f32.mrb[0].mxu0
    %v654 = vadd.f32 0.0, %v653
    %v655 = vpop.f32.mrb[0].mxu0
    %656 = vdwg.mxu0
    %657 = vmatprep.subr.mxu0 0.0
    %658 = vmatpush1.msra.mxu0 %v315
    %659 = vmatprep.subr.mxu0 0.0
    %660 = vmatpush1.msra.mxu0 %v316
    %661 = vmatprep.subr.mxu0 0.0
    %662 = vmatpush1.msra.mxu0 %v317
    %663 = vmatprep.subr.mxu0 0.0
    %664 = vmatpush1.msra.mxu0 %v318
    %665 = vmatprep.subr.mxu0 0.0
    %666 = vmatpush1.msra.mxu0 0.0
    %667 = vmatprep.subr.mxu0 0.0
    %668 = vmatpush1.msra.mxu0 0.0
    %669 = vmatprep.subr.mxu0 0.0
    %670 = vmatpush1.msra.mxu0 0.0
    %671 = vmatprep.subr.mxu0 0.0
    %672 = vmatpush1.msra.mxu0 0.0
    %673 = vmatprep.subr.mxu0 0.0
    %674 = vmatpush1.msra.mxu0 0.0
    %675 = vmatprep.subr.mxu0 0.0
    %676 = vmatpush1.msra.mxu0 0.0
    %677 = vmatprep.subr.mxu0 0.0
    %678 = vmatpush1.msra.mxu0 0.0
    %679 = vmatprep.subr.mxu0 0.0
    %680 = vmatpush1.msra.mxu0 0.0
    %681 = vmatprep.subr.mxu0 0.0
    %682 = vmatpush1.msra.mxu0 0.0
    %683 = vmatprep.subr.mxu0 0.0
    %684 = vmatpush1.msra.mxu0 0.0
    %685 = vmatprep.subr.mxu0 0.0
    %686 = vmatpush1.msra.mxu0 0.0
    %687 = vmatprep.subr.mxu0 0.0
    %688 = vmatpush1.msra.mxu0 0.0
    %689 = vmatprep.subr.mxu0 0.0
    %690 = vmatpush1.msra.mxu0 0.0
    %691 = vmatprep.subr.mxu0 0.0
    %692 = vmatpush1.msra.mxu0 0.0
    %693 = vmatprep.subr.mxu0 0.0
    %694 = vmatpush1.msra.mxu0 0.0
    %695 = vmatprep.subr.mxu0 0.0
    %696 = vmatpush1.msra.mxu0 0.0
    %697 = vmatprep.subr.mxu0 0.0
    %698 = vmatpush1.msra.mxu0 0.0
    %699 = vmatprep.subr.mxu0 0.0
    %700 = vmatpush1.msra.mxu0 0.0
    %701 = vmatprep.subr.mxu0 0.0
    %702 = vmatpush1.msra.mxu0 0.0
    %703 = vmatprep.subr.mxu0 0.0
    %704 = vmatpush1.msra.mxu0 0.0
    %705 = vmatprep.subr.mxu0 0.0
    %706 = vmatpush1.msra.mxu0 0.0
    %707 = vmatprep.subr.mxu0 0.0
    %708 = vmatpush1.msra.mxu0 0.0
    %709 = vmatprep.subr.mxu0 0.0
    %710 = vmatpush1.msra.mxu0 0.0
    %711 = vmatprep.subr.mxu0 0.0
    %712 = vmatpush1.msra.mxu0 0.0
    %713 = vmatprep.subr.mxu0 0.0
    %714 = vmatpush1.msra.mxu0 0.0
    %715 = vmatprep.subr.mxu0 0.0
    %716 = vmatpush1.msra.mxu0 0.0
    %717 = vmatprep.subr.mxu0 0.0
    %718 = vmatpush1.msra.mxu0 0.0
    %719 = vmatprep.subr.mxu0 0.0
    %720 = vmatpush1.msra.mxu0 0.0
    %721 = vmatprep.mubr.f32.mxu0 0.0
    %722 = vmatmul.mubr.f32.gmra.mrb[0].mxu0 %v585
    %v723 = vpop.f32.mrb[0].mxu0
    %v724 = vadd.f32 0.0, %v723
    %v725 = vpop.f32.mrb[0].mxu0
    %726 = vdwg.mxu0
    %727 = vmatprep.subr.mxu0 0.0
    %728 = vmatpush1.msra.mxu0 %v320
    %729 = vmatprep.subr.mxu0 0.0
    %730 = vmatpush1.msra.mxu0 %v321
    %731 = vmatprep.subr.mxu0 0.0
    %732 = vmatpush1.msra.mxu0 %v322
    %733 = vmatprep.subr.mxu0 0.0
    %734 = vmatpush1.msra.mxu0 %v323
    %735 = vmatprep.subr.mxu0 0.0
    %736 = vmatpush1.msra.mxu0 0.0
    %737 = vmatprep.subr.mxu0 0.0
    %738 = vmatpush1.msra.mxu0 0.0
    %739 = vmatprep.subr.mxu0 0.0
    %740 = vmatpush1.msra.mxu0 0.0
    %741 = vmatprep.subr.mxu0 0.0
    %742 = vmatpush1.msra.mxu0 0.0
    %743 = vmatprep.subr.mxu0 0.0
    %744 = vmatpush1.msra.mxu0 0.0
    %745 = vmatprep.subr.mxu0 0.0
    %746 = vmatpush1.msra.mxu0 0.0
    %747 = vmatprep.subr.mxu0 0.0
    %748 = vmatpush1.msra.mxu0 0.0
    %749 = vmatprep.subr.mxu0 0.0
    %750 = vmatpush1.msra.mxu0 0.0
    %751 = vmatprep.subr.mxu0 0.0
    %752 = vmatpush1.msra.mxu0 0.0
    %753 = vmatprep.subr.mxu0 0.0
    %754 = vmatpush1.msra.mxu0 0.0
    %755 = vmatprep.subr.mxu0 0.0
    %756 = vmatpush1.msra.mxu0 0.0
    %757 = vmatprep.subr.mxu0 0.0
    %758 = vmatpush1.msra.mxu0 0.0
    %759 = vmatprep.subr.mxu0 0.0
    %760 = vmatpush1.msra.mxu0 0.0
    %761 = vmatprep.subr.mxu0 0.0
    %762 = vmatpush1.msra.mxu0 0.0
    %763 = vmatprep.subr.mxu0 0.0
    %764 = vmatpush1.msra.mxu0 0.0
    %765 = vmatprep.subr.mxu0 0.0
    %766 = vmatpush1.msra.mxu0 0.0
    %767 = vmatprep.subr.mxu0 0.0
    %768 = vmatpush1.msra.mxu0 0.0
    %769 = vmatprep.subr.mxu0 0.0
    %770 = vmatpush1.msra.mxu0 0.0
    %771 = vmatprep.subr.mxu0 0.0
    %772 = vmatpush1.msra.mxu0 0.0
    %773 = vmatprep.subr.mxu0 0.0
    %774 = vmatpush1.msra.mxu0 0.0
    %775 = vmatprep.subr.mxu0 0.0
    %776 = vmatpush1.msra.mxu0 0.0
    %777 = vmatprep.subr.mxu0 0.0
    %778 = vmatpush1.msra.mxu0 0.0
    %779 = vmatprep.subr.mxu0 0.0
    %780 = vmatpush1.msra.mxu0 0.0
    %781 = vmatprep.subr.mxu0 0.0
    %782 = vmatpush1.msra.mxu0 0.0
    %783 = vmatprep.subr.mxu0 0.0
    %784 = vmatpush1.msra.mxu0 0.0
    %785 = vmatprep.subr.mxu0 0.0
    %786 = vmatpush1.msra.mxu0 0.0
    %787 = vmatprep.subr.mxu0 0.0
    %788 = vmatpush1.msra.mxu0 0.0
    %789 = vmatprep.subr.mxu0 0.0
    %790 = vmatpush1.msra.mxu0 0.0
    %791 = vmatprep.mubr.f32.mxu0 0.0
    %792 = vmatmul.mubr.f32.gmra.mrb[0].mxu0 %v585
    %v793 = vpop.f32.mrb[0].mxu0
    %v794 = vadd.f32 0.0, %v793
    %v795 = vpop.f32.mrb[0].mxu0
    %796 = vdwg.mxu0
    %v798 = vrot.slane %v654, 6
    %v800 = vadd.f32 %v136, %v798
    %v801 = vadd.f32 %v800, %v548
    %v802 = vxor.u32 %v801, 2147483648
    %v803 = vmul.f32 %v802, 1.442695
    %v804 = vpow.pop %v803
    %v805 = vadd.f32 %v804, 1.0
    %v806 = vrcp.pop %v805
    %v807 = vmul.f32 1.0, %v806
    %v809 = vrot.slane %v724, 6
    %v811 = vadd.f32 %v219, %v809
    %v812 = vadd.f32 %v811, %v562
    %v813 = vxor.u32 %v812, 2147483648
    %v814 = vmul.f32 %v813, 1.442695
    %v815 = vpow.pop %v814
    %v816 = vadd.f32 %v815, 1.0
    %v817 = vrcp.pop %v816
    %v818 = vmul.f32 1.0, %v817
    %v820 = vrot.slane %v794, 6
    %v822 = vmul.f32 %v807, %v820
    %v823 = vadd.f32 %v302, %v822
    %v824 = vadd.f32 %v823, %v577
    %v825 = vtanh.pop %v824
    %v827 = vrot.slane %v825, 2
    %v829 = vsub.f32 %v583, %v827
    %v831 = vrot.slane %v829, 6
    %v833 = vmul.f32 %v818, %v831
    %v834 = vadd.f32 %v825, %v833
    %v836 = vrot.slane %v834, 2
    %v837 = vsel %vm329, %v836, 0
    %839 = vmatprep.subr.mxu0 0.0
    %840 = vmatpush1.msra.mxu0 %v310
    %841 = vmatprep.subr.mxu0 0.0
    %842 = vmatpush1.msra.mxu0 %v311
    %843 = vmatprep.subr.mxu0 0.0
    %844 = vmatpush1.msra.mxu0 %v312
    %845 = vmatprep.subr.mxu0 0.0
    %846 = vmatpush1.msra.mxu0 %v313
    %847 = vmatprep.subr.mxu0 0.0
    %848 = vmatpush1.msra.mxu0 0.0
    %849 = vmatprep.subr.mxu0 0.0
    %850 = vmatpush1.msra.mxu0 0.0
    %851 = vmatprep.subr.mxu0 0.0
    %852 = vmatpush1.msra.mxu0 0.0
    %853 = vmatprep.subr.mxu0 0.0
    %854 = vmatpush1.msra.mxu0 0.0
    %855 = vmatprep.subr.mxu0 0.0
    %856 = vmatpush1.msra.mxu0 0.0
    %857 = vmatprep.subr.mxu0 0.0
    %858 = vmatpush1.msra.mxu0 0.0
    %859 = vmatprep.subr.mxu0 0.0
    %860 = vmatpush1.msra.mxu0 0.0
    %861 = vmatprep.subr.mxu0 0.0
    %862 = vmatpush1.msra.mxu0 0.0
    %863 = vmatprep.subr.mxu0 0.0
    %864 = vmatpush1.msra.mxu0 0.0
    %865 = vmatprep.subr.mxu0 0.0
    %866 = vmatpush1.msra.mxu0 0.0
    %867 = vmatprep.subr.mxu0 0.0
    %868 = vmatpush1.msra.mxu0 0.0
    %869 = vmatprep.subr.mxu0 0.0
    %870 = vmatpush1.msra.mxu0 0.0
    %871 = vmatprep.subr.mxu0 0.0
    %872 = vmatpush1.msra.mxu0 0.0
    %873 = vmatprep.subr.mxu0 0.0
    %874 = vmatpush1.msra.mxu0 0.0
    %875 = vmatprep.subr.mxu0 0.0
    %876 = vmatpush1.msra.mxu0 0.0
    %877 = vmatprep.subr.mxu0 0.0
    %878 = vmatpush1.msra.mxu0 0.0
    %879 = vmatprep.subr.mxu0 0.0
    %880 = vmatpush1.msra.mxu0 0.0
    %881 = vmatprep.subr.mxu0 0.0
    %882 = vmatpush1.msra.mxu0 0.0
    %883 = vmatprep.subr.mxu0 0.0
    %884 = vmatpush1.msra.mxu0 0.0
    %885 = vmatprep.subr.mxu0 0.0
    %886 = vmatpush1.msra.mxu0 0.0
    %887 = vmatprep.subr.mxu0 0.0
    %888 = vmatpush1.msra.mxu0 0.0
    %889 = vmatprep.subr.mxu0 0.0
    %890 = vmatpush1.msra.mxu0 0.0
    %891 = vmatprep.subr.mxu0 0.0
    %892 = vmatpush1.msra.mxu0 0.0
    %893 = vmatprep.subr.mxu0 0.0
    %894 = vmatpush1.msra.mxu0 0.0
    %895 = vmatprep.subr.mxu0 0.0
    %896 = vmatpush1.msra.mxu0 0.0
    %897 = vmatprep.subr.mxu0 0.0
    %898 = vmatpush1.msra.mxu0 0.0
    %899 = vmatprep.subr.mxu0 0.0
    %900 = vmatpush1.msra.mxu0 0.0
    %901 = vmatprep.subr.mxu0 0.0
    %902 = vmatpush1.msra.mxu0 0.0
    %903 = vmatprep.mubr.f32.mxu0 0.0
    %904 = vmatmul.mubr.f32.gmra.mrb[0].mxu0 %v837
    %v905 = vpop.f32.mrb[0].mxu0
    %v906 = vadd.f32 0.0, %v905
    %v907 = vpop.f32.mrb[0].mxu0
    %908 = vdwg.mxu0
    %909 = vmatprep.subr.mxu0 0.0
    %910 = vmatpush1.msra.mxu0 %v315
    %911 = vmatprep.subr.mxu0 0.0
    %912 = vmatpush1.msra.mxu0 %v316
    %913 = vmatprep.subr.mxu0 0.0
    %914 = vmatpush1.msra.mxu0 %v317
    %915 = vmatprep.subr.mxu0 0.0
    %916 = vmatpush1.msra.mxu0 %v318
    %917 = vmatprep.subr.mxu0 0.0
    %918 = vmatpush1.msra.mxu0 0.0
    %919 = vmatprep.subr.mxu0 0.0
    %920 = vmatpush1.msra.mxu0 0.0
    %921 = vmatprep.subr.mxu0 0.0
    %922 = vmatpush1.msra.mxu0 0.0
    %923 = vmatprep.subr.mxu0 0.0
    %924 = vmatpush1.msra.mxu0 0.0
    %925 = vmatprep.subr.mxu0 0.0
    %926 = vmatpush1.msra.mxu0 0.0
    %927 = vmatprep.subr.mxu0 0.0
    %928 = vmatpush1.msra.mxu0 0.0
    %929 = vmatprep.subr.mxu0 0.0
    %930 = vmatpush1.msra.mxu0 0.0
    %931 = vmatprep.subr.mxu0 0.0
    %932 = vmatpush1.msra.mxu0 0.0
    %933 = vmatprep.subr.mxu0 0.0
    %934 = vmatpush1.msra.mxu0 0.0
    %935 = vmatprep.subr.mxu0 0.0
    %936 = vmatpush1.msra.mxu0 0.0
    %937 = vmatprep.subr.mxu0 0.0
    %938 = vmatpush1.msra.mxu0 0.0
    %939 = vmatprep.subr.mxu0 0.0
    %940 = vmatpush1.msra.mxu0 0.0
    %941 = vmatprep.subr.mxu0 0.0
    %942 = vmatpush1.msra.mxu0 0.0
    %943 = vmatprep.subr.mxu0 0.0
    %944 = vmatpush1.msra.mxu0 0.0
    %945 = vmatprep.subr.mxu0 0.0
    %946 = vmatpush1.msra.mxu0 0.0
    %947 = vmatprep.subr.mxu0 0.0
    %948 = vmatpush1.msra.mxu0 0.0
    %949 = vmatprep.subr.mxu0 0.0
    %950 = vmatpush1.msra.mxu0 0.0
    %951 = vmatprep.subr.mxu0 0.0
    %952 = vmatpush1.msra.mxu0 0.0
    %953 = vmatprep.subr.mxu0 0.0
    %954 = vmatpush1.msra.mxu0 0.0
    %955 = vmatprep.subr.mxu0 0.0
    %956 = vmatpush1.msra.mxu0 0.0
    %957 = vmatprep.subr.mxu0 0.0
    %958 = vmatpush1.msra.mxu0 0.0
    %959 = vmatprep.subr.mxu0 0.0
    %960 = vmatpush1.msra.mxu0 0.0
    %961 = vmatprep.subr.mxu0 0.0
    %962 = vmatpush1.msra.mxu0 0.0
    %963 = vmatprep.subr.mxu0 0.0
    %964 = vmatpush1.msra.mxu0 0.0
    %965 = vmatprep.subr.mxu0 0.0
    %966 = vmatpush1.msra.mxu0 0.0
    %967 = vmatprep.subr.mxu0 0.0
    %968 = vmatpush1.msra.mxu0 0.0
    %969 = vmatprep.subr.mxu0 0.0
    %970 = vmatpush1.msra.mxu0 0.0
    %971 = vmatprep.subr.mxu0 0.0
    %972 = vmatpush1.msra.mxu0 0.0
    %973 = vmatprep.mubr.f32.mxu0 0.0
    %974 = vmatmul.mubr.f32.gmra.mrb[0].mxu0 %v837
    %v975 = vpop.f32.mrb[0].mxu0
    %v976 = vadd.f32 0.0, %v975
    %v977 = vpop.f32.mrb[0].mxu0
    %978 = vdwg.mxu0
    %979 = vmatprep.subr.mxu0 0.0
    %980 = vmatpush1.msra.mxu0 %v320
    %981 = vmatprep.subr.mxu0 0.0
    %982 = vmatpush1.msra.mxu0 %v321
    %983 = vmatprep.subr.mxu0 0.0
    %984 = vmatpush1.msra.mxu0 %v322
    %985 = vmatprep.subr.mxu0 0.0
    %986 = vmatpush1.msra.mxu0 %v323
    %987 = vmatprep.subr.mxu0 0.0
    %988 = vmatpush1.msra.mxu0 0.0
    %989 = vmatprep.subr.mxu0 0.0
    %990 = vmatpush1.msra.mxu0 0.0
    %991 = vmatprep.subr.mxu0 0.0
    %992 = vmatpush1.msra.mxu0 0.0
    %993 = vmatprep.subr.mxu0 0.0
    %994 = vmatpush1.msra.mxu0 0.0
    %995 = vmatprep.subr.mxu0 0.0
    %996 = vmatpush1.msra.mxu0 0.0
    %997 = vmatprep.subr.mxu0 0.0
    %998 = vmatpush1.msra.mxu0 0.0
    %999 = vmatprep.subr.mxu0 0.0
    %1000 = vmatpush1.msra.mxu0 0.0
    %1001 = vmatprep.subr.mxu0 0.0
    %1002 = vmatpush1.msra.mxu0 0.0
    %1003 = vmatprep.subr.mxu0 0.0
    %1004 = vmatpush1.msra.mxu0 0.0
    %1005 = vmatprep.subr.mxu0 0.0
    %1006 = vmatpush1.msra.mxu0 0.0
    %1007 = vmatprep.subr.mxu0 0.0
    %1008 = vmatpush1.msra.mxu0 0.0
    %1009 = vmatprep.subr.mxu0 0.0
    %1010 = vmatpush1.msra.mxu0 0.0
    %1011 = vmatprep.subr.mxu0 0.0
    %1012 = vmatpush1.msra.mxu0 0.0
    %1013 = vmatprep.subr.mxu0 0.0
    %1014 = vmatpush1.msra.mxu0 0.0
    %1015 = vmatprep.subr.mxu0 0.0
    %1016 = vmatpush1.msra.mxu0 0.0
    %1017 = vmatprep.subr.mxu0 0.0
    %1018 = vmatpush1.msra.mxu0 0.0
    %1019 = vmatprep.subr.mxu0 0.0
    %1020 = vmatpush1.msra.mxu0 0.0
    %1021 = vmatprep.subr.mxu0 0.0
    %1022 = vmatpush1.msra.mxu0 0.0
    %1023 = vmatprep.subr.mxu0 0.0
    %1024 = vmatpush1.msra.mxu0 0.0
    %1025 = vmatprep.subr.mxu0 0.0
    %1026 = vmatpush1.msra.mxu0 0.0
    %1027 = vmatprep.subr.mxu0 0.0
    %1028 = vmatpush1.msra.mxu0 0.0
    %1029 = vmatprep.subr.mxu0 0.0
    %1030 = vmatpush1.msra.mxu0 0.0
    %1031 = vmatprep.subr.mxu0 0.0
    %1032 = vmatpush1.msra.mxu0 0.0
    %1033 = vmatprep.subr.mxu0 0.0
    %1034 = vmatpush1.msra.mxu0 0.0
    %1035 = vmatprep.subr.mxu0 0.0
    %1036 = vmatpush1.msra.mxu0 0.0
    %1037 = vmatprep.subr.mxu0 0.0
    %1038 = vmatpush1.msra.mxu0 0.0
    %1039 = vmatprep.subr.mxu0 0.0
    %1040 = vmatpush1.msra.mxu0 0.0
    %1041 = vmatprep.subr.mxu0 0.0
    %1042 = vmatpush1.msra.mxu0 0.0
    %1043 = vmatprep.mubr.f32.mxu0 0.0
    %1044 = vmatmul.mubr.f32.gmra.mrb[0].mxu0 %v837
    %v1045 = vpop.f32.mrb[0].mxu0
    %v1046 = vadd.f32 0.0, %v1045
    %v1047 = vpop.f32.mrb[0].mxu0
    %1048 = vdwg.mxu0
    %v1050 = vrot.slane %v906, 4
    %v1052 = vadd.f32 %v136, %v1050
    %v1053 = vadd.f32 %v1052, %v548
    %v1054 = vxor.u32 %v1053, 2147483648
    %v1055 = vmul.f32 %v1054, 1.442695
    %v1056 = vpow.pop %v1055
    %v1057 = vadd.f32 %v1056, 1.0
    %v1058 = vrcp.pop %v1057
    %v1059 = vmul.f32 1.0, %v1058
    %v1061 = vrot.slane %v976, 4
    %v1063 = vadd.f32 %v219, %v1061
    %v1064 = vadd.f32 %v1063, %v562
    %v1065 = vxor.u32 %v1064, 2147483648
    %v1066 = vmul.f32 %v1065, 1.442695
    %v1067 = vpow.pop %v1066
    %v1068 = vadd.f32 %v1067, 1.0
    %v1069 = vrcp.pop %v1068
    %v1070 = vmul.f32 1.0, %v1069
    %v1072 = vrot.slane %v1046, 4
    %v1074 = vmul.f32 %v1059, %v1072
    %v1075 = vadd.f32 %v302, %v1074
    %v1076 = vadd.f32 %v1075, %v577
    %v1077 = vtanh.pop %v1076
    %v1079 = vrot.slane %v1077, 2
    %v1081 = vsub.f32 %v834, %v1079
    %v1083 = vrot.slane %v1081, 6
    %v1085 = vmul.f32 %v1070, %v1083
    %v1086 = vadd.f32 %v1077, %v1085
    %v1088 = vrot.slane %v1086, 4
    %v1089 = vsel %vm329, %v1088, 0
    %1091 = vmatprep.subr.mxu0 0.0
    %1092 = vmatpush1.msra.mxu0 %v310
    %1093 = vmatprep.subr.mxu0 0.0
    %1094 = vmatpush1.msra.mxu0 %v311
    %1095 = vmatprep.subr.mxu0 0.0
    %1096 = vmatpush1.msra.mxu0 %v312
    %1097 = vmatprep.subr.mxu0 0.0
    %1098 = vmatpush1.msra.mxu0 %v313
    %1099 = vmatprep.subr.mxu0 0.0
    %1100 = vmatpush1.msra.mxu0 0.0
    %1101 = vmatprep.subr.mxu0 0.0
    %1102 = vmatpush1.msra.mxu0 0.0
    %1103 = vmatprep.subr.mxu0 0.0
    %1104 = vmatpush1.msra.mxu0 0.0
    %1105 = vmatprep.subr.mxu0 0.0
    %1106 = vmatpush1.msra.mxu0 0.0
    %1107 = vmatprep.subr.mxu0 0.0
    %1108 = vmatpush1.msra.mxu0 0.0
    %1109 = vmatprep.subr.mxu0 0.0
    %1110 = vmatpush1.msra.mxu0 0.0
    %1111 = vmatprep.subr.mxu0 0.0
    %1112 = vmatpush1.msra.mxu0 0.0
    %1113 = vmatprep.subr.mxu0 0.0
    %1114 = vmatpush1.msra.mxu0 0.0
    %1115 = vmatprep.subr.mxu0 0.0
    %1116 = vmatpush1.msra.mxu0 0.0
    %1117 = vmatprep.subr.mxu0 0.0
    %1118 = vmatpush1.msra.mxu0 0.0
    %1119 = vmatprep.subr.mxu0 0.0
    %1120 = vmatpush1.msra.mxu0 0.0
    %1121 = vmatprep.subr.mxu0 0.0
    %1122 = vmatpush1.msra.mxu0 0.0
    %1123 = vmatprep.subr.mxu0 0.0
    %1124 = vmatpush1.msra.mxu0 0.0
    %1125 = vmatprep.subr.mxu0 0.0
    %1126 = vmatpush1.msra.mxu0 0.0
    %1127 = vmatprep.subr.mxu0 0.0
    %1128 = vmatpush1.msra.mxu0 0.0
    %1129 = vmatprep.subr.mxu0 0.0
    %1130 = vmatpush1.msra.mxu0 0.0
    %1131 = vmatprep.subr.mxu0 0.0
    %1132 = vmatpush1.msra.mxu0 0.0
    %1133 = vmatprep.subr.mxu0 0.0
    %1134 = vmatpush1.msra.mxu0 0.0
    %1135 = vmatprep.subr.mxu0 0.0
    %1136 = vmatpush1.msra.mxu0 0.0
    %1137 = vmatprep.subr.mxu0 0.0
    %1138 = vmatpush1.msra.mxu0 0.0
    %1139 = vmatprep.subr.mxu0 0.0
    %1140 = vmatpush1.msra.mxu0 0.0
    %1141 = vmatprep.subr.mxu0 0.0
    %1142 = vmatpush1.msra.mxu0 0.0
    %1143 = vmatprep.subr.mxu0 0.0
    %1144 = vmatpush1.msra.mxu0 0.0
    %1145 = vmatprep.subr.mxu0 0.0
    %1146 = vmatpush1.msra.mxu0 0.0
    %1147 = vmatprep.subr.mxu0 0.0
    %1148 = vmatpush1.msra.mxu0 0.0
    %1149 = vmatprep.subr.mxu0 0.0
    %1150 = vmatpush1.msra.mxu0 0.0
    %1151 = vmatprep.subr.mxu0 0.0
    %1152 = vmatpush1.msra.mxu0 0.0
    %1153 = vmatprep.subr.mxu0 0.0
    %1154 = vmatpush1.msra.mxu0 0.0
    %1155 = vmatprep.mubr.f32.mxu0 0.0
    %1156 = vmatmul.mubr.f32.gmra.mrb[0].mxu0 %v1089
    %v1157 = vpop.f32.mrb[0].mxu0
    %v1158 = vadd.f32 0.0, %v1157
    %v1159 = vpop.f32.mrb[0].mxu0
    %1160 = vdwg.mxu0
    %1161 = vmatprep.subr.mxu0 0.0
    %1162 = vmatpush1.msra.mxu0 %v315
    %1163 = vmatprep.subr.mxu0 0.0
    %1164 = vmatpush1.msra.mxu0 %v316
    %1165 = vmatprep.subr.mxu0 0.0
    %1166 = vmatpush1.msra.mxu0 %v317
    %1167 = vmatprep.subr.mxu0 0.0
    %1168 = vmatpush1.msra.mxu0 %v318
    %1169 = vmatprep.subr.mxu0 0.0
    %1170 = vmatpush1.msra.mxu0 0.0
    %1171 = vmatprep.subr.mxu0 0.0
    %1172 = vmatpush1.msra.mxu0 0.0
    %1173 = vmatprep.subr.mxu0 0.0
    %1174 = vmatpush1.msra.mxu0 0.0
    %1175 = vmatprep.subr.mxu0 0.0
    %1176 = vmatpush1.msra.mxu0 0.0
    %1177 = vmatprep.subr.mxu0 0.0
    %1178 = vmatpush1.msra.mxu0 0.0
    %1179 = vmatprep.subr.mxu0 0.0
    %1180 = vmatpush1.msra.mxu0 0.0
    %1181 = vmatprep.subr.mxu0 0.0
    %1182 = vmatpush1.msra.mxu0 0.0
    %1183 = vmatprep.subr.mxu0 0.0
    %1184 = vmatpush1.msra.mxu0 0.0
    %1185 = vmatprep.subr.mxu0 0.0
    %1186 = vmatpush1.msra.mxu0 0.0
    %1187 = vmatprep.subr.mxu0 0.0
    %1188 = vmatpush1.msra.mxu0 0.0
    %1189 = vmatprep.subr.mxu0 0.0
    %1190 = vmatpush1.msra.mxu0 0.0
    %1191 = vmatprep.subr.mxu0 0.0
    %1192 = vmatpush1.msra.mxu0 0.0
    %1193 = vmatprep.subr.mxu0 0.0
    %1194 = vmatpush1.msra.mxu0 0.0
    %1195 = vmatprep.subr.mxu0 0.0
    %1196 = vmatpush1.msra.mxu0 0.0
    %1197 = vmatprep.subr.mxu0 0.0
    %1198 = vmatpush1.msra.mxu0 0.0
    %1199 = vmatprep.subr.mxu0 0.0
    %1200 = vmatpush1.msra.mxu0 0.0
    %1201 = vmatprep.subr.mxu0 0.0
    %1202 = vmatpush1.msra.mxu0 0.0
    %1203 = vmatprep.subr.mxu0 0.0
    %1204 = vmatpush1.msra.mxu0 0.0
    %1205 = vmatprep.subr.mxu0 0.0
    %1206 = vmatpush1.msra.mxu0 0.0
    %1207 = vmatprep.subr.mxu0 0.0
    %1208 = vmatpush1.msra.mxu0 0.0
    %1209 = vmatprep.subr.mxu0 0.0
    %1210 = vmatpush1.msra.mxu0 0.0
    %1211 = vmatprep.subr.mxu0 0.0
    %1212 = vmatpush1.msra.mxu0 0.0
    %1213 = vmatprep.subr.mxu0 0.0
    %1214 = vmatpush1.msra.mxu0 0.0
    %1215 = vmatprep.subr.mxu0 0.0
    %1216 = vmatpush1.msra.mxu0 0.0
    %1217 = vmatprep.subr.mxu0 0.0
    %1218 = vmatpush1.msra.mxu0 0.0
    %1219 = vmatprep.subr.mxu0 0.0
    %1220 = vmatpush1.msra.mxu0 0.0
    %1221 = vmatprep.subr.mxu0 0.0
    %1222 = vmatpush1.msra.mxu0 0.0
    %1223 = vmatprep.subr.mxu0 0.0
    %1224 = vmatpush1.msra.mxu0 0.0
    %1225 = vmatprep.mubr.f32.mxu0 0.0
    %1226 = vmatmul.mubr.f32.gmra.mrb[0].mxu0 %v1089
    %v1227 = vpop.f32.mrb[0].mxu0
    %v1228 = vadd.f32 0.0, %v1227
    %v1229 = vpop.f32.mrb[0].mxu0
    %1230 = vdwg.mxu0
    %1231 = vmatprep.subr.mxu0 0.0
    %1232 = vmatpush1.msra.mxu0 %v320
    %1233 = vmatprep.subr.mxu0 0.0
    %1234 = vmatpush1.msra.mxu0 %v321
    %1235 = vmatprep.subr.mxu0 0.0
    %1236 = vmatpush1.msra.mxu0 %v322
    %1237 = vmatprep.subr.mxu0 0.0
    %1238 = vmatpush1.msra.mxu0 %v323
    %1239 = vmatprep.subr.mxu0 0.0
    %1240 = vmatpush1.msra.mxu0 0.0
    %1241 = vmatprep.subr.mxu0 0.0
    %1242 = vmatpush1.msra.mxu0 0.0
    %1243 = vmatprep.subr.mxu0 0.0
    %1244 = vmatpush1.msra.mxu0 0.0
    %1245 = vmatprep.subr.mxu0 0.0
    %1246 = vmatpush1.msra.mxu0 0.0
    %1247 = vmatprep.subr.mxu0 0.0
    %1248 = vmatpush1.msra.mxu0 0.0
    %1249 = vmatprep.subr.mxu0 0.0
    %1250 = vmatpush1.msra.mxu0 0.0
    %1251 = vmatprep.subr.mxu0 0.0
    %1252 = vmatpush1.msra.mxu0 0.0
    %1253 = vmatprep.subr.mxu0 0.0
    %1254 = vmatpush1.msra.mxu0 0.0
    %1255 = vmatprep.subr.mxu0 0.0
    %1256 = vmatpush1.msra.mxu0 0.0
    %1257 = vmatprep.subr.mxu0 0.0
    %1258 = vmatpush1.msra.mxu0 0.0
    %1259 = vmatprep.subr.mxu0 0.0
    %1260 = vmatpush1.msra.mxu0 0.0
    %1261 = vmatprep.subr.mxu0 0.0
    %1262 = vmatpush1.msra.mxu0 0.0
    %1263 = vmatprep.subr.mxu0 0.0
    %1264 = vmatpush1.msra.mxu0 0.0
    %1265 = vmatprep.subr.mxu0 0.0
    %1266 = vmatpush1.msra.mxu0 0.0
    %1267 = vmatprep.subr.mxu0 0.0
    %1268 = vmatpush1.msra.mxu0 0.0
    %1269 = vmatprep.subr.mxu0 0.0
    %1270 = vmatpush1.msra.mxu0 0.0
    %1271 = vmatprep.subr.mxu0 0.0
    %1272 = vmatpush1.msra.mxu0 0.0
    %1273 = vmatprep.subr.mxu0 0.0
    %1274 = vmatpush1.msra.mxu0 0.0
    %1275 = vmatprep.subr.mxu0 0.0
    %1276 = vmatpush1.msra.mxu0 0.0
    %1277 = vmatprep.subr.mxu0 0.0
    %1278 = vmatpush1.msra.mxu0 0.0
    %1279 = vmatprep.subr.mxu0 0.0
    %1280 = vmatpush1.msra.mxu0 0.0
    %1281 = vmatprep.subr.mxu0 0.0
    %1282 = vmatpush1.msra.mxu0 0.0
    %1283 = vmatprep.subr.mxu0 0.0
    %1284 = vmatpush1.msra.mxu0 0.0
    %1285 = vmatprep.subr.mxu0 0.0
    %1286 = vmatpush1.msra.mxu0 0.0
    %1287 = vmatprep.subr.mxu0 0.0
    %1288 = vmatpush1.msra.mxu0 0.0
    %1289 = vmatprep.subr.mxu0 0.0
    %1290 = vmatpush1.msra.mxu0 0.0
    %1291 = vmatprep.subr.mxu0 0.0
    %1292 = vmatpush1.msra.mxu0 0.0
    %1293 = vmatprep.subr.mxu0 0.0
    %1294 = vmatpush1.msra.mxu0 0.0
    %1295 = vmatprep.mubr.f32.mxu0 0.0
    %1296 = vmatmul.mubr.f32.gmra.mrb[0].mxu0 %v1089
    %v1297 = vpop.f32.mrb[0].mxu0
    %v1298 = vadd.f32 0.0, %v1297
    %v1299 = vpop.f32.mrb[0].mxu0
    %1300 = vdwg.mxu0
    %v1302 = vrot.slane %v1158, 2
    %v1304 = vadd.f32 %v136, %v1302
    %v1305 = vadd.f32 %v1304, %v548
    %v1306 = vxor.u32 %v1305, 2147483648
    %v1307 = vmul.f32 %v1306, 1.442695
    %v1308 = vpow.pop %v1307
    %v1309 = vadd.f32 %v1308, 1.0
    %v1310 = vrcp.pop %v1309
    %v1311 = vmul.f32 1.0, %v1310
    %v1313 = vrot.slane %v1228, 2
    %v1315 = vadd.f32 %v219, %v1313
    %v1316 = vadd.f32 %v1315, %v562
    %v1317 = vxor.u32 %v1316, 2147483648
    %v1318 = vmul.f32 %v1317, 1.442695
    %v1319 = vpow.pop %v1318
    %v1320 = vadd.f32 %v1319, 1.0
    %v1321 = vrcp.pop %v1320
    %v1322 = vmul.f32 1.0, %v1321
    %v1324 = vrot.slane %v1298, 2
    %v1326 = vmul.f32 %v1311, %v1324
    %v1327 = vadd.f32 %v302, %v1326
    %v1328 = vadd.f32 %v1327, %v577
    %v1329 = vtanh.pop %v1328
    %v1331 = vrot.slane %v1329, 2
    %v1333 = vsub.f32 %v1086, %v1331
    %v1335 = vrot.slane %v1333, 6
    %v1337 = vmul.f32 %v1322, %v1335
    %v1338 = vadd.f32 %v1329, %v1337
    %v1340 = vrot.slane %v1338, 6
    %v1341 = vsel %vm329, %v1340, 0
    %1343 = vmatprep.subr.mxu0 0.0
    %1344 = vmatpush1.msra.mxu0 %v310
    %1345 = vmatprep.subr.mxu0 0.0
    %1346 = vmatpush1.msra.mxu0 %v311
    %1347 = vmatprep.subr.mxu0 0.0
    %1348 = vmatpush1.msra.mxu0 %v312
    %1349 = vmatprep.subr.mxu0 0.0
    %1350 = vmatpush1.msra.mxu0 %v313
    %1351 = vmatprep.subr.mxu0 0.0
    %1352 = vmatpush1.msra.mxu0 0.0
    %1353 = vmatprep.subr.mxu0 0.0
    %1354 = vmatpush1.msra.mxu0 0.0
    %1355 = vmatprep.subr.mxu0 0.0
    %1356 = vmatpush1.msra.mxu0 0.0
    %1357 = vmatprep.subr.mxu0 0.0
    %1358 = vmatpush1.msra.mxu0 0.0
    %1359 = vmatprep.subr.mxu0 0.0
    %1360 = vmatpush1.msra.mxu0 0.0
    %1361 = vmatprep.subr.mxu0 0.0
    %1362 = vmatpush1.msra.mxu0 0.0
    %1363 = vmatprep.subr.mxu0 0.0
    %1364 = vmatpush1.msra.mxu0 0.0
    %1365 = vmatprep.subr.mxu0 0.0
    %1366 = vmatpush1.msra.mxu0 0.0
    %1367 = vmatprep.subr.mxu0 0.0
    %1368 = vmatpush1.msra.mxu0 0.0
    %1369 = vmatprep.subr.mxu0 0.0
    %1370 = vmatpush1.msra.mxu0 0.0
    %1371 = vmatprep.subr.mxu0 0.0
    %1372 = vmatpush1.msra.mxu0 0.0
    %1373 = vmatprep.subr.mxu0 0.0
    %1374 = vmatpush1.msra.mxu0 0.0
    %1375 = vmatprep.subr.mxu0 0.0
    %1376 = vmatpush1.msra.mxu0 0.0
    %1377 = vmatprep.subr.mxu0 0.0
    %1378 = vmatpush1.msra.mxu0 0.0
    %1379 = vmatprep.subr.mxu0 0.0
    %1380 = vmatpush1.msra.mxu0 0.0
    %1381 = vmatprep.subr.mxu0 0.0
    %1382 = vmatpush1.msra.mxu0 0.0
    %1383 = vmatprep.subr.mxu0 0.0
    %1384 = vmatpush1.msra.mxu0 0.0
    %1385 = vmatprep.subr.mxu0 0.0
    %1386 = vmatpush1.msra.mxu0 0.0
    %1387 = vmatprep.subr.mxu0 0.0
    %1388 = vmatpush1.msra.mxu0 0.0
    %1389 = vmatprep.subr.mxu0 0.0
    %1390 = vmatpush1.msra.mxu0 0.0
    %1391 = vmatprep.subr.mxu0 0.0
    %1392 = vmatpush1.msra.mxu0 0.0
    %1393 = vmatprep.subr.mxu0 0.0
    %1394 = vmatpush1.msra.mxu0 0.0
    %1395 = vmatprep.subr.mxu0 0.0
    %1396 = vmatpush1.msra.mxu0 0.0
    %1397 = vmatprep.subr.mxu0 0.0
    %1398 = vmatpush1.msra.mxu0 0.0
    %1399 = vmatprep.subr.mxu0 0.0
    %1400 = vmatpush1.msra.mxu0 0.0
    %1401 = vmatprep.subr.mxu0 0.0
    %1402 = vmatpush1.msra.mxu0 0.0
    %1403 = vmatprep.subr.mxu0 0.0
    %1404 = vmatpush1.msra.mxu0 0.0
    %1405 = vmatprep.subr.mxu0 0.0
    %1406 = vmatpush1.msra.mxu0 0.0
    %1407 = vmatprep.mubr.f32.mxu0 0.0
    %1408 = vmatmul.mubr.f32.gmra.mrb[0].mxu0 %v1341
    %v1409 = vpop.f32.mrb[0].mxu0
    %v1410 = vadd.f32 0.0, %v1409
    %v1411 = vpop.f32.mrb[0].mxu0
    %1412 = vdwg.mxu0
    %1413 = vmatprep.subr.mxu0 0.0
    %1414 = vmatpush1.msra.mxu0 %v315
    %1415 = vmatprep.subr.mxu0 0.0
    %1416 = vmatpush1.msra.mxu0 %v316
    %1417 = vmatprep.subr.mxu0 0.0
    %1418 = vmatpush1.msra.mxu0 %v317
    %1419 = vmatprep.subr.mxu0 0.0
    %1420 = vmatpush1.msra.mxu0 %v318
    %1421 = vmatprep.subr.mxu0 0.0
    %1422 = vmatpush1.msra.mxu0 0.0
    %1423 = vmatprep.subr.mxu0 0.0
    %1424 = vmatpush1.msra.mxu0 0.0
    %1425 = vmatprep.subr.mxu0 0.0
    %1426 = vmatpush1.msra.mxu0 0.0
    %1427 = vmatprep.subr.mxu0 0.0
    %1428 = vmatpush1.msra.mxu0 0.0
    %1429 = vmatprep.subr.mxu0 0.0
    %1430 = vmatpush1.msra.mxu0 0.0
    %1431 = vmatprep.subr.mxu0 0.0
    %1432 = vmatpush1.msra.mxu0 0.0
    %1433 = vmatprep.subr.mxu0 0.0
    %1434 = vmatpush1.msra.mxu0 0.0
    %1435 = vmatprep.subr.mxu0 0.0
    %1436 = vmatpush1.msra.mxu0 0.0
    %1437 = vmatprep.subr.mxu0 0.0
    %1438 = vmatpush1.msra.mxu0 0.0
    %1439 = vmatprep.subr.mxu0 0.0
    %1440 = vmatpush1.msra.mxu0 0.0
    %1441 = vmatprep.subr.mxu0 0.0
    %1442 = vmatpush1.msra.mxu0 0.0
    %1443 = vmatprep.subr.mxu0 0.0
    %1444 = vmatpush1.msra.mxu0 0.0
    %1445 = vmatprep.subr.mxu0 0.0
    %1446 = vmatpush1.msra.mxu0 0.0
    %1447 = vmatprep.subr.mxu0 0.0
    %1448 = vmatpush1.msra.mxu0 0.0
    %1449 = vmatprep.subr.mxu0 0.0
    %1450 = vmatpush1.msra.mxu0 0.0
    %1451 = vmatprep.subr.mxu0 0.0
    %1452 = vmatpush1.msra.mxu0 0.0
    %1453 = vmatprep.subr.mxu0 0.0
    %1454 = vmatpush1.msra.mxu0 0.0
    %1455 = vmatprep.subr.mxu0 0.0
    %1456 = vmatpush1.msra.mxu0 0.0
    %1457 = vmatprep.subr.mxu0 0.0
    %1458 = vmatpush1.msra.mxu0 0.0
    %1459 = vmatprep.subr.mxu0 0.0
    %1460 = vmatpush1.msra.mxu0 0.0
    %1461 = vmatprep.subr.mxu0 0.0
    %1462 = vmatpush1.msra.mxu0 0.0
    %1463 = vmatprep.subr.mxu0 0.0
    %1464 = vmatpush1.msra.mxu0 0.0
    %1465 = vmatprep.subr.mxu0 0.0
    %1466 = vmatpush1.msra.mxu0 0.0
    %1467 = vmatprep.subr.mxu0 0.0
    %1468 = vmatpush1.msra.mxu0 0.0
    %1469 = vmatprep.subr.mxu0 0.0
    %1470 = vmatpush1.msra.mxu0 0.0
    %1471 = vmatprep.subr.mxu0 0.0
    %1472 = vmatpush1.msra.mxu0 0.0
    %1473 = vmatprep.subr.mxu0 0.0
    %1474 = vmatpush1.msra.mxu0 0.0
    %1475 = vmatprep.subr.mxu0 0.0
    %1476 = vmatpush1.msra.mxu0 0.0
    %1477 = vmatprep.mubr.f32.mxu0 0.0
    %1478 = vmatmul.mubr.f32.gmra.mrb[0].mxu0 %v1341
    %v1479 = vpop.f32.mrb[0].mxu0
    %v1480 = vadd.f32 0.0, %v1479
    %v1481 = vpop.f32.mrb[0].mxu0
    %1482 = vdwg.mxu0
    %1483 = vmatprep.subr.mxu0 0.0
    %1484 = vmatpush1.msra.mxu0 %v320
    %1485 = vmatprep.subr.mxu0 0.0
    %1486 = vmatpush1.msra.mxu0 %v321
    %1487 = vmatprep.subr.mxu0 0.0
    %1488 = vmatpush1.msra.mxu0 %v322
    %1489 = vmatprep.subr.mxu0 0.0
    %1490 = vmatpush1.msra.mxu0 %v323
    %1491 = vmatprep.subr.mxu0 0.0
    %1492 = vmatpush1.msra.mxu0 0.0
    %1493 = vmatprep.subr.mxu0 0.0
    %1494 = vmatpush1.msra.mxu0 0.0
    %1495 = vmatprep.subr.mxu0 0.0
    %1496 = vmatpush1.msra.mxu0 0.0
    %1497 = vmatprep.subr.mxu0 0.0
    %1498 = vmatpush1.msra.mxu0 0.0
    %1499 = vmatprep.subr.mxu0 0.0
    %1500 = vmatpush1.msra.mxu0 0.0
    %1501 = vmatprep.subr.mxu0 0.0
    %1502 = vmatpush1.msra.mxu0 0.0
    %1503 = vmatprep.subr.mxu0 0.0
    %1504 = vmatpush1.msra.mxu0 0.0
    %1505 = vmatprep.subr.mxu0 0.0
    %1506 = vmatpush1.msra.mxu0 0.0
    %1507 = vmatprep.subr.mxu0 0.0
    %1508 = vmatpush1.msra.mxu0 0.0
    %1509 = vmatprep.subr.mxu0 0.0
    %1510 = vmatpush1.msra.mxu0 0.0
    %1511 = vmatprep.subr.mxu0 0.0
    %1512 = vmatpush1.msra.mxu0 0.0
    %1513 = vmatprep.subr.mxu0 0.0
    %1514 = vmatpush1.msra.mxu0 0.0
    %1515 = vmatprep.subr.mxu0 0.0
    %1516 = vmatpush1.msra.mxu0 0.0
    %1517 = vmatprep.subr.mxu0 0.0
    %1518 = vmatpush1.msra.mxu0 0.0
    %1519 = vmatprep.subr.mxu0 0.0
    %1520 = vmatpush1.msra.mxu0 0.0
    %1521 = vmatprep.subr.mxu0 0.0
    %1522 = vmatpush1.msra.mxu0 0.0
    %1523 = vmatprep.subr.mxu0 0.0
    %1524 = vmatpush1.msra.mxu0 0.0
    %1525 = vmatprep.subr.mxu0 0.0
    %1526 = vmatpush1.msra.mxu0 0.0
    %1527 = vmatprep.subr.mxu0 0.0
    %1528 = vmatpush1.msra.mxu0 0.0
    %1529 = vmatprep.subr.mxu0 0.0
    %1530 = vmatpush1.msra.mxu0 0.0
    %1531 = vmatprep.subr.mxu0 0.0
    %1532 = vmatpush1.msra.mxu0 0.0
    %1533 = vmatprep.subr.mxu0 0.0
    %1534 = vmatpush1.msra.mxu0 0.0
    %1535 = vmatprep.subr.mxu0 0.0
    %1536 = vmatpush1.msra.mxu0 0.0
    %1537 = vmatprep.subr.mxu0 0.0
    %1538 = vmatpush1.msra.mxu0 0.0
    %1539 = vmatprep.subr.mxu0 0.0
    %1540 = vmatpush1.msra.mxu0 0.0
    %1541 = vmatprep.subr.mxu0 0.0
    %1542 = vmatpush1.msra.mxu0 0.0
    %1543 = vmatprep.subr.mxu0 0.0
    %1544 = vmatpush1.msra.mxu0 0.0
    %1545 = vmatprep.subr.mxu0 0.0
    %1546 = vmatpush1.msra.mxu0 0.0
    %1547 = vmatprep.mubr.f32.mxu0 0.0
    %1548 = vmatmul.mubr.f32.gmra.mrb[0].mxu0 %v1341
    %v1549 = vpop.f32.mrb[0].mxu0
    %v1550 = vadd.f32 0.0, %v1549
    %v1551 = vpop.f32.mrb[0].mxu0
    %1552 = vdwg.mxu0
    %v1553 = vadd.f32 %v141, %v1410
    %v1554 = vadd.f32 %v1553, %v548
    %v1555 = vxor.u32 %v1554, 2147483648
    %v1556 = vmul.f32 %v1555, 1.442695
    %v1557 = vpow.pop %v1556
    %v1558 = vadd.f32 %v1557, 1.0
    %v1559 = vrcp.pop %v1558
    %v1560 = vmul.f32 1.0, %v1559
    %v1561 = vadd.f32 %v224, %v1480
    %v1562 = vadd.f32 %v1561, %v562
    %v1563 = vxor.u32 %v1562, 2147483648
    %v1564 = vmul.f32 %v1563, 1.442695
    %v1565 = vpow.pop %v1564
    %v1566 = vadd.f32 %v1565, 1.0
    %v1567 = vrcp.pop %v1566
    %v1568 = vmul.f32 1.0, %v1567
    %v1569 = vmul.f32 %v1560, %v1550
    %v1570 = vadd.f32 %v307, %v1569
    %v1571 = vadd.f32 %v1570, %v577
    %v1572 = vtanh.pop %v1571
    %v1574 = vrot.slane %v1572, 2
    %v1576 = vsub.f32 %v1338, %v1574
    %v1578 = vrot.slane %v1576, 6
    %v1580 = vmul.f32 %v1568, %v1578
    %v1581 = vadd.f32 %v1572, %v1580
    %v1583 = vsel %vm329, %v1581, 0
    %1585 = vmatprep.subr.mxu0 0.0
    %1586 = vmatpush1.msra.mxu0 %v310
    %1587 = vmatprep.subr.mxu0 0.0
    %1588 = vmatpush1.msra.mxu0 %v311
    %1589 = vmatprep.subr.mxu0 0.0
    %1590 = vmatpush1.msra.mxu0 %v312
    %1591 = vmatprep.subr.mxu0 0.0
    %1592 = vmatpush1.msra.mxu0 %v313
    %1593 = vmatprep.subr.mxu0 0.0
    %1594 = vmatpush1.msra.mxu0 0.0
    %1595 = vmatprep.subr.mxu0 0.0
    %1596 = vmatpush1.msra.mxu0 0.0
    %1597 = vmatprep.subr.mxu0 0.0
    %1598 = vmatpush1.msra.mxu0 0.0
    %1599 = vmatprep.subr.mxu0 0.0
    %1600 = vmatpush1.msra.mxu0 0.0
    %1601 = vmatprep.subr.mxu0 0.0
    %1602 = vmatpush1.msra.mxu0 0.0
    %1603 = vmatprep.subr.mxu0 0.0
    %1604 = vmatpush1.msra.mxu0 0.0
    %1605 = vmatprep.subr.mxu0 0.0
    %1606 = vmatpush1.msra.mxu0 0.0
    %1607 = vmatprep.subr.mxu0 0.0
    %1608 = vmatpush1.msra.mxu0 0.0
    %1609 = vmatprep.subr.mxu0 0.0
    %1610 = vmatpush1.msra.mxu0 0.0
    %1611 = vmatprep.subr.mxu0 0.0
    %1612 = vmatpush1.msra.mxu0 0.0
    %1613 = vmatprep.subr.mxu0 0.0
    %1614 = vmatpush1.msra.mxu0 0.0
    %1615 = vmatprep.subr.mxu0 0.0
    %1616 = vmatpush1.msra.mxu0 0.0
    %1617 = vmatprep.subr.mxu0 0.0
    %1618 = vmatpush1.msra.mxu0 0.0
    %1619 = vmatprep.subr.mxu0 0.0
    %1620 = vmatpush1.msra.mxu0 0.0
    %1621 = vmatprep.subr.mxu0 0.0
    %1622 = vmatpush1.msra.mxu0 0.0
    %1623 = vmatprep.subr.mxu0 0.0
    %1624 = vmatpush1.msra.mxu0 0.0
    %1625 = vmatprep.subr.mxu0 0.0
    %1626 = vmatpush1.msra.mxu0 0.0
    %1627 = vmatprep.subr.mxu0 0.0
    %1628 = vmatpush1.msra.mxu0 0.0
    %1629 = vmatprep.subr.mxu0 0.0
    %1630 = vmatpush1.msra.mxu0 0.0
    %1631 = vmatprep.subr.mxu0 0.0
    %1632 = vmatpush1.msra.mxu0 0.0
    %1633 = vmatprep.subr.mxu0 0.0
    %1634 = vmatpush1.msra.mxu0 0.0
    %1635 = vmatprep.subr.mxu0 0.0
    %1636 = vmatpush1.msra.mxu0 0.0
    %1637 = vmatprep.subr.mxu0 0.0
    %1638 = vmatpush1.msra.mxu0 0.0
    %1639 = vmatprep.subr.mxu0 0.0
    %1640 = vmatpush1.msra.mxu0 0.0
    %1641 = vmatprep.subr.mxu0 0.0
    %1642 = vmatpush1.msra.mxu0 0.0
    %1643 = vmatprep.subr.mxu0 0.0
    %1644 = vmatpush1.msra.mxu0 0.0
    %1645 = vmatprep.subr.mxu0 0.0
    %1646 = vmatpush1.msra.mxu0 0.0
    %1647 = vmatprep.subr.mxu0 0.0
    %1648 = vmatpush1.msra.mxu0 0.0
    %1649 = vmatprep.mubr.f32.mxu0 0.0
    %1650 = vmatmul.mubr.f32.gmra.mrb[0].mxu0 %v1583
    %v1651 = vpop.f32.mrb[0].mxu0
    %v1652 = vadd.f32 0.0, %v1651
    %v1653 = vpop.f32.mrb[0].mxu0
    %1654 = vdwg.mxu0
    %1655 = vmatprep.subr.mxu0 0.0
    %1656 = vmatpush1.msra.mxu0 %v315
    %1657 = vmatprep.subr.mxu0 0.0
    %1658 = vmatpush1.msra.mxu0 %v316
    %1659 = vmatprep.subr.mxu0 0.0
    %1660 = vmatpush1.msra.mxu0 %v317
    %1661 = vmatprep.subr.mxu0 0.0
    %1662 = vmatpush1.msra.mxu0 %v318
    %1663 = vmatprep.subr.mxu0 0.0
    %1664 = vmatpush1.msra.mxu0 0.0
    %1665 = vmatprep.subr.mxu0 0.0
    %1666 = vmatpush1.msra.mxu0 0.0
    %1667 = vmatprep.subr.mxu0 0.0
    %1668 = vmatpush1.msra.mxu0 0.0
    %1669 = vmatprep.subr.mxu0 0.0
    %1670 = vmatpush1.msra.mxu0 0.0
    %1671 = vmatprep.subr.mxu0 0.0
    %1672 = vmatpush1.msra.mxu0 0.0
    %1673 = vmatprep.subr.mxu0 0.0
    %1674 = vmatpush1.msra.mxu0 0.0
    %1675 = vmatprep.subr.mxu0 0.0
    %1676 = vmatpush1.msra.mxu0 0.0
    %1677 = vmatprep.subr.mxu0 0.0
    %1678 = vmatpush1.msra.mxu0 0.0
    %1679 = vmatprep.subr.mxu0 0.0
    %1680 = vmatpush1.msra.mxu0 0.0
    %1681 = vmatprep.subr.mxu0 0.0
    %1682 = vmatpush1.msra.mxu0 0.0
    %1683 = vmatprep.subr.mxu0 0.0
    %1684 = vmatpush1.msra.mxu0 0.0
    %1685 = vmatprep.subr.mxu0 0.0
    %1686 = vmatpush1.msra.mxu0 0.0
    %1687 = vmatprep.subr.mxu0 0.0
    %1688 = vmatpush1.msra.mxu0 0.0
    %1689 = vmatprep.subr.mxu0 0.0
    %1690 = vmatpush1.msra.mxu0 0.0
    %1691 = vmatprep.subr.mxu0 0.0
    %1692 = vmatpush1.msra.mxu0 0.0
    %1693 = vmatprep.subr.mxu0 0.0
    %1694 = vmatpush1.msra.mxu0 0.0
    %1695 = vmatprep.subr.mxu0 0.0
    %1696 = vmatpush1.msra.mxu0 0.0
    %1697 = vmatprep.subr.mxu0 0.0
    %1698 = vmatpush1.msra.mxu0 0.0
    %1699 = vmatprep.subr.mxu0 0.0
    %1700 = vmatpush1.msra.mxu0 0.0
    %1701 = vmatprep.subr.mxu0 0.0
    %1702 = vmatpush1.msra.mxu0 0.0
    %1703 = vmatprep.subr.mxu0 0.0
    %1704 = vmatpush1.msra.mxu0 0.0
    %1705 = vmatprep.subr.mxu0 0.0
    %1706 = vmatpush1.msra.mxu0 0.0
    %1707 = vmatprep.subr.mxu0 0.0
    %1708 = vmatpush1.msra.mxu0 0.0
    %1709 = vmatprep.subr.mxu0 0.0
    %1710 = vmatpush1.msra.mxu0 0.0
    %1711 = vmatprep.subr.mxu0 0.0
    %1712 = vmatpush1.msra.mxu0 0.0
    %1713 = vmatprep.subr.mxu0 0.0
    %1714 = vmatpush1.msra.mxu0 0.0
    %1715 = vmatprep.subr.mxu0 0.0
    %1716 = vmatpush1.msra.mxu0 0.0
    %1717 = vmatprep.subr.mxu0 0.0
    %1718 = vmatpush1.msra.mxu0 0.0
    %1719 = vmatprep.mubr.f32.mxu0 0.0
    %1720 = vmatmul.mubr.f32.gmra.mrb[0].mxu0 %v1583
    %v1721 = vpop.f32.mrb[0].mxu0
    %v1722 = vadd.f32 0.0, %v1721
    %v1723 = vpop.f32.mrb[0].mxu0
    %1724 = vdwg.mxu0
    %1725 = vmatprep.subr.mxu0 0.0
    %1726 = vmatpush1.msra.mxu0 %v320
    %1727 = vmatprep.subr.mxu0 0.0
    %1728 = vmatpush1.msra.mxu0 %v321
    %1729 = vmatprep.subr.mxu0 0.0
    %1730 = vmatpush1.msra.mxu0 %v322
    %1731 = vmatprep.subr.mxu0 0.0
    %1732 = vmatpush1.msra.mxu0 %v323
    %1733 = vmatprep.subr.mxu0 0.0
    %1734 = vmatpush1.msra.mxu0 0.0
    %1735 = vmatprep.subr.mxu0 0.0
    %1736 = vmatpush1.msra.mxu0 0.0
    %1737 = vmatprep.subr.mxu0 0.0
    %1738 = vmatpush1.msra.mxu0 0.0
    %1739 = vmatprep.subr.mxu0 0.0
    %1740 = vmatpush1.msra.mxu0 0.0
    %1741 = vmatprep.subr.mxu0 0.0
    %1742 = vmatpush1.msra.mxu0 0.0
    %1743 = vmatprep.subr.mxu0 0.0
    %1744 = vmatpush1.msra.mxu0 0.0
    %1745 = vmatprep.subr.mxu0 0.0
    %1746 = vmatpush1.msra.mxu0 0.0
    %1747 = vmatprep.subr.mxu0 0.0
    %1748 = vmatpush1.msra.mxu0 0.0
    %1749 = vmatprep.subr.mxu0 0.0
    %1750 = vmatpush1.msra.mxu0 0.0
    %1751 = vmatprep.subr.mxu0 0.0
    %1752 = vmatpush1.msra.mxu0 0.0
    %1753 = vmatprep.subr.mxu0 0.0
    %1754 = vmatpush1.msra.mxu0 0.0
    %1755 = vmatprep.subr.mxu0 0.0
    %1756 = vmatpush1.msra.mxu0 0.0
    %1757 = vmatprep.subr.mxu0 0.0
    %1758 = vmatpush1.msra.mxu0 0.0
    %1759 = vmatprep.subr.mxu0 0.0
    %1760 = vmatpush1.msra.mxu0 0.0
    %1761 = vmatprep.subr.mxu0 0.0
    %1762 = vmatpush1.msra.mxu0 0.0
    %1763 = vmatprep.subr.mxu0 0.0
    %1764 = vmatpush1.msra.mxu0 0.0
    %1765 = vmatprep.subr.mxu0 0.0
    %1766 = vmatpush1.msra.mxu0 0.0
    %1767 = vmatprep.subr.mxu0 0.0
    %1768 = vmatpush1.msra.mxu0 0.0
    %1769 = vmatprep.subr.mxu0 0.0
    %1770 = vmatpush1.msra.mxu0 0.0
    %1771 = vmatprep.subr.mxu0 0.0
    %1772 = vmatpush1.msra.mxu0 0.0
    %1773 = vmatprep.subr.mxu0 0.0
    %1774 = vmatpush1.msra.mxu0 0.0
    %1775 = vmatprep.subr.mxu0 0.0
    %1776 = vmatpush1.msra.mxu0 0.0
    %1777 = vmatprep.subr.mxu0 0.0
    %1778 = vmatpush1.msra.mxu0 0.0
    %1779 = vmatprep.subr.mxu0 0.0
    %1780 = vmatpush1.msra.mxu0 0.0
    %1781 = vmatprep.subr.mxu0 0.0
    %1782 = vmatpush1.msra.mxu0 0.0
    %1783 = vmatprep.subr.mxu0 0.0
    %1784 = vmatpush1.msra.mxu0 0.0
    %1785 = vmatprep.subr.mxu0 0.0
    %1786 = vmatpush1.msra.mxu0 0.0
    %1787 = vmatprep.subr.mxu0 0.0
    %1788 = vmatpush1.msra.mxu0 0.0
    %1789 = vmatprep.mubr.f32.mxu0 0.0
    %1790 = vmatmul.mubr.f32.gmra.mrb[0].mxu0 %v1583
    %v1791 = vpop.f32.mrb[0].mxu0
    %v1792 = vadd.f32 0.0, %v1791
    %v1793 = vpop.f32.mrb[0].mxu0
    %1794 = vdwg.mxu0
    %v1796 = vrot.slane %v1652, 6
    %v1798 = vadd.f32 %v141, %v1796
    %v1799 = vadd.f32 %v1798, %v548
    %v1800 = vxor.u32 %v1799, 2147483648
    %v1801 = vmul.f32 %v1800, 1.442695
    %v1802 = vpow.pop %v1801
    %v1803 = vadd.f32 %v1802, 1.0
    %v1804 = vrcp.pop %v1803
    %v1805 = vmul.f32 1.0, %v1804
    %v1807 = vrot.slane %v1722, 6
    %v1809 = vadd.f32 %v224, %v1807
    %v1810 = vadd.f32 %v1809, %v562
    %v1811 = vxor.u32 %v1810, 2147483648
    %v1812 = vmul.f32 %v1811, 1.442695
    %v1813 = vpow.pop %v1812
    %v1814 = vadd.f32 %v1813, 1.0
    %v1815 = vrcp.pop %v1814
    %v1816 = vmul.f32 1.0, %v1815
    %v1818 = vrot.slane %v1792, 6
    %v1820 = vmul.f32 %v1805, %v1818
    %v1821 = vadd.f32 %v307, %v1820
    %v1822 = vadd.f32 %v1821, %v577
    %v1823 = vtanh.pop %v1822
    %v1825 = vrot.slane %v1823, 2
    %v1827 = vsub.f32 %v1581, %v1825
    %v1829 = vrot.slane %v1827, 6
    %v1831 = vmul.f32 %v1816, %v1829
    %v1832 = vadd.f32 %v1823, %v1831
    %v1834 = vrot.slane %v1832, 2
    %v1835 = vsel %vm329, %v1834, 0
    %1837 = vmatprep.subr.mxu0 0.0
    %1838 = vmatpush1.msra.mxu0 %v310
    %1839 = vmatprep.subr.mxu0 0.0
    %1840 = vmatpush1.msra.mxu0 %v311
    %1841 = vmatprep.subr.mxu0 0.0
    %1842 = vmatpush1.msra.mxu0 %v312
    %1843 = vmatprep.subr.mxu0 0.0
    %1844 = vmatpush1.msra.mxu0 %v313
    %1845 = vmatprep.subr.mxu0 0.0
    %1846 = vmatpush1.msra.mxu0 0.0
    %1847 = vmatprep.subr.mxu0 0.0
    %1848 = vmatpush1.msra.mxu0 0.0
    %1849 = vmatprep.subr.mxu0 0.0
    %1850 = vmatpush1.msra.mxu0 0.0
    %1851 = vmatprep.subr.mxu0 0.0
    %1852 = vmatpush1.msra.mxu0 0.0
    %1853 = vmatprep.subr.mxu0 0.0
    %1854 = vmatpush1.msra.mxu0 0.0
    %1855 = vmatprep.subr.mxu0 0.0
    %1856 = vmatpush1.msra.mxu0 0.0
    %1857 = vmatprep.subr.mxu0 0.0
    %1858 = vmatpush1.msra.mxu0 0.0
    %1859 = vmatprep.subr.mxu0 0.0
    %1860 = vmatpush1.msra.mxu0 0.0
    %1861 = vmatprep.subr.mxu0 0.0
    %1862 = vmatpush1.msra.mxu0 0.0
    %1863 = vmatprep.subr.mxu0 0.0
    %1864 = vmatpush1.msra.mxu0 0.0
    %1865 = vmatprep.subr.mxu0 0.0
    %1866 = vmatpush1.msra.mxu0 0.0
    %1867 = vmatprep.subr.mxu0 0.0
    %1868 = vmatpush1.msra.mxu0 0.0
    %1869 = vmatprep.subr.mxu0 0.0
    %1870 = vmatpush1.msra.mxu0 0.0
    %1871 = vmatprep.subr.mxu0 0.0
    %1872 = vmatpush1.msra.mxu0 0.0
    %1873 = vmatprep.subr.mxu0 0.0
    %1874 = vmatpush1.msra.mxu0 0.0
    %1875 = vmatprep.subr.mxu0 0.0
    %1876 = vmatpush1.msra.mxu0 0.0
    %1877 = vmatprep.subr.mxu0 0.0
    %1878 = vmatpush1.msra.mxu0 0.0
    %1879 = vmatprep.subr.mxu0 0.0
    %1880 = vmatpush1.msra.mxu0 0.0
    %1881 = vmatprep.subr.mxu0 0.0
    %1882 = vmatpush1.msra.mxu0 0.0
    %1883 = vmatprep.subr.mxu0 0.0
    %1884 = vmatpush1.msra.mxu0 0.0
    %1885 = vmatprep.subr.mxu0 0.0
    %1886 = vmatpush1.msra.mxu0 0.0
    %1887 = vmatprep.subr.mxu0 0.0
    %1888 = vmatpush1.msra.mxu0 0.0
    %1889 = vmatprep.subr.mxu0 0.0
    %1890 = vmatpush1.msra.mxu0 0.0
    %1891 = vmatprep.subr.mxu0 0.0
    %1892 = vmatpush1.msra.mxu0 0.0
    %1893 = vmatprep.subr.mxu0 0.0
    %1894 = vmatpush1.msra.mxu0 0.0
    %1895 = vmatprep.subr.mxu0 0.0
    %1896 = vmatpush1.msra.mxu0 0.0
    %1897 = vmatprep.subr.mxu0 0.0
    %1898 = vmatpush1.msra.mxu0 0.0
    %1899 = vmatprep.subr.mxu0 0.0
    %1900 = vmatpush1.msra.mxu0 0.0
    %1901 = vmatprep.mubr.f32.mxu0 0.0
    %1902 = vmatmul.mubr.f32.gmra.mrb[0].mxu0 %v1835
    %v1903 = vpop.f32.mrb[0].mxu0
    %v1904 = vadd.f32 0.0, %v1903
    %v1905 = vpop.f32.mrb[0].mxu0
    %1906 = vdwg.mxu0
    %1907 = vmatprep.subr.mxu0 0.0
    %1908 = vmatpush1.msra.mxu0 %v315
    %1909 = vmatprep.subr.mxu0 0.0
    %1910 = vmatpush1.msra.mxu0 %v316
    %1911 = vmatprep.subr.mxu0 0.0
    %1912 = vmatpush1.msra.mxu0 %v317
    %1913 = vmatprep.subr.mxu0 0.0
    %1914 = vmatpush1.msra.mxu0 %v318
    %1915 = vmatprep.subr.mxu0 0.0
    %1916 = vmatpush1.msra.mxu0 0.0
    %1917 = vmatprep.subr.mxu0 0.0
    %1918 = vmatpush1.msra.mxu0 0.0
    %1919 = vmatprep.subr.mxu0 0.0
    %1920 = vmatpush1.msra.mxu0 0.0
    %1921 = vmatprep.subr.mxu0 0.0
    %1922 = vmatpush1.msra.mxu0 0.0
    %1923 = vmatprep.subr.mxu0 0.0
    %1924 = vmatpush1.msra.mxu0 0.0
    %1925 = vmatprep.subr.mxu0 0.0
    %1926 = vmatpush1.msra.mxu0 0.0
    %1927 = vmatprep.subr.mxu0 0.0
    %1928 = vmatpush1.msra.mxu0 0.0
    %1929 = vmatprep.subr.mxu0 0.0
    %1930 = vmatpush1.msra.mxu0 0.0
    %1931 = vmatprep.subr.mxu0 0.0
    %1932 = vmatpush1.msra.mxu0 0.0
    %1933 = vmatprep.subr.mxu0 0.0
    %1934 = vmatpush1.msra.mxu0 0.0
    %1935 = vmatprep.subr.mxu0 0.0
    %1936 = vmatpush1.msra.mxu0 0.0
    %1937 = vmatprep.subr.mxu0 0.0
    %1938 = vmatpush1.msra.mxu0 0.0
    %1939 = vmatprep.subr.mxu0 0.0
    %1940 = vmatpush1.msra.mxu0 0.0
    %1941 = vmatprep.subr.mxu0 0.0
    %1942 = vmatpush1.msra.mxu0 0.0
    %1943 = vmatprep.subr.mxu0 0.0
    %1944 = vmatpush1.msra.mxu0 0.0
    %1945 = vmatprep.subr.mxu0 0.0
    %1946 = vmatpush1.msra.mxu0 0.0
    %1947 = vmatprep.subr.mxu0 0.0
    %1948 = vmatpush1.msra.mxu0 0.0
    %1949 = vmatprep.subr.mxu0 0.0
    %1950 = vmatpush1.msra.mxu0 0.0
    %1951 = vmatprep.subr.mxu0 0.0
    %1952 = vmatpush1.msra.mxu0 0.0
    %1953 = vmatprep.subr.mxu0 0.0
    %1954 = vmatpush1.msra.mxu0 0.0
    %1955 = vmatprep.subr.mxu0 0.0
    %1956 = vmatpush1.msra.mxu0 0.0
    %1957 = vmatprep.subr.mxu0 0.0
    %1958 = vmatpush1.msra.mxu0 0.0
    %1959 = vmatprep.subr.mxu0 0.0
    %1960 = vmatpush1.msra.mxu0 0.0
    %1961 = vmatprep.subr.mxu0 0.0
    %1962 = vmatpush1.msra.mxu0 0.0
    %1963 = vmatprep.subr.mxu0 0.0
    %1964 = vmatpush1.msra.mxu0 0.0
    %1965 = vmatprep.subr.mxu0 0.0
    %1966 = vmatpush1.msra.mxu0 0.0
    %1967 = vmatprep.subr.mxu0 0.0
    %1968 = vmatpush1.msra.mxu0 0.0
    %1969 = vmatprep.subr.mxu0 0.0
    %1970 = vmatpush1.msra.mxu0 0.0
    %1971 = vmatprep.mubr.f32.mxu0 0.0
    %1972 = vmatmul.mubr.f32.gmra.mrb[0].mxu0 %v1835
    %v1973 = vpop.f32.mrb[0].mxu0
    %v1974 = vadd.f32 0.0, %v1973
    %v1975 = vpop.f32.mrb[0].mxu0
    %1976 = vdwg.mxu0
    %1977 = vmatprep.subr.mxu0 0.0
    %1978 = vmatpush1.msra.mxu0 %v320
    %1979 = vmatprep.subr.mxu0 0.0
    %1980 = vmatpush1.msra.mxu0 %v321
    %1981 = vmatprep.subr.mxu0 0.0
    %1982 = vmatpush1.msra.mxu0 %v322
    %1983 = vmatprep.subr.mxu0 0.0
    %1984 = vmatpush1.msra.mxu0 %v323
    %1985 = vmatprep.subr.mxu0 0.0
    %1986 = vmatpush1.msra.mxu0 0.0
    %1987 = vmatprep.subr.mxu0 0.0
    %1988 = vmatpush1.msra.mxu0 0.0
    %1989 = vmatprep.subr.mxu0 0.0
    %1990 = vmatpush1.msra.mxu0 0.0
    %1991 = vmatprep.subr.mxu0 0.0
    %1992 = vmatpush1.msra.mxu0 0.0
    %1993 = vmatprep.subr.mxu0 0.0
    %1994 = vmatpush1.msra.mxu0 0.0
    %1995 = vmatprep.subr.mxu0 0.0
    %1996 = vmatpush1.msra.mxu0 0.0
    %1997 = vmatprep.subr.mxu0 0.0
    %1998 = vmatpush1.msra.mxu0 0.0
    %1999 = vmatprep.subr.mxu0 0.0
    %2000 = vmatpush1.msra.mxu0 0.0
    %2001 = vmatprep.subr.mxu0 0.0
    %2002 = vmatpush1.msra.mxu0 0.0
    %2003 = vmatprep.subr.mxu0 0.0
    %2004 = vmatpush1.msra.mxu0 0.0
    %2005 = vmatprep.subr.mxu0 0.0
    %2006 = vmatpush1.msra.mxu0 0.0
    %2007 = vmatprep.subr.mxu0 0.0
    %2008 = vmatpush1.msra.mxu0 0.0
    %2009 = vmatprep.subr.mxu0 0.0
    %2010 = vmatpush1.msra.mxu0 0.0
    %2011 = vmatprep.subr.mxu0 0.0
    %2012 = vmatpush1.msra.mxu0 0.0
    %2013 = vmatprep.subr.mxu0 0.0
    %2014 = vmatpush1.msra.mxu0 0.0
    %2015 = vmatprep.subr.mxu0 0.0
    %2016 = vmatpush1.msra.mxu0 0.0
    %2017 = vmatprep.subr.mxu0 0.0
    %2018 = vmatpush1.msra.mxu0 0.0
    %2019 = vmatprep.subr.mxu0 0.0
    %2020 = vmatpush1.msra.mxu0 0.0
    %2021 = vmatprep.subr.mxu0 0.0
    %2022 = vmatpush1.msra.mxu0 0.0
    %2023 = vmatprep.subr.mxu0 0.0
    %2024 = vmatpush1.msra.mxu0 0.0
    %2025 = vmatprep.subr.mxu0 0.0
    %2026 = vmatpush1.msra.mxu0 0.0
    %2027 = vmatprep.subr.mxu0 0.0
    %2028 = vmatpush1.msra.mxu0 0.0
    %2029 = vmatprep.subr.mxu0 0.0
    %2030 = vmatpush1.msra.mxu0 0.0
    %2031 = vmatprep.subr.mxu0 0.0
    %2032 = vmatpush1.msra.mxu0 0.0
    %2033 = vmatprep.subr.mxu0 0.0
    %2034 = vmatpush1.msra.mxu0 0.0
    %2035 = vmatprep.subr.mxu0 0.0
    %2036 = vmatpush1.msra.mxu0 0.0
    %2037 = vmatprep.subr.mxu0 0.0
    %2038 = vmatpush1.msra.mxu0 0.0
    %2039 = vmatprep.subr.mxu0 0.0
    %2040 = vmatpush1.msra.mxu0 0.0
    %2041 = vmatprep.mubr.f32.mxu0 0.0
    %2042 = vmatmul.mubr.f32.gmra.mrb[0].mxu0 %v1835
    %v2043 = vpop.f32.mrb[0].mxu0
    %v2044 = vadd.f32 0.0, %v2043
    %v2045 = vpop.f32.mrb[0].mxu0
    %2046 = vdwg.mxu0
    %v2048 = vrot.slane %v1904, 4
    %v2050 = vadd.f32 %v141, %v2048
    %v2051 = vadd.f32 %v2050, %v548
    %v2052 = vxor.u32 %v2051, 2147483648
    %v2053 = vmul.f32 %v2052, 1.442695
    %v2054 = vpow.pop %v2053
    %v2055 = vadd.f32 %v2054, 1.0
    %v2056 = vrcp.pop %v2055
    %v2057 = vmul.f32 1.0, %v2056
    %v2059 = vrot.slane %v1974, 4
    %v2061 = vadd.f32 %v224, %v2059
    %v2062 = vadd.f32 %v2061, %v562
    %v2063 = vxor.u32 %v2062, 2147483648
    %v2064 = vmul.f32 %v2063, 1.442695
    %v2065 = vpow.pop %v2064
    %v2066 = vadd.f32 %v2065, 1.0
    %v2067 = vrcp.pop %v2066
    %v2068 = vmul.f32 1.0, %v2067
    %v2070 = vrot.slane %v2044, 4
    %v2072 = vmul.f32 %v2057, %v2070
    %v2073 = vadd.f32 %v307, %v2072
    %v2074 = vadd.f32 %v2073, %v577
    %v2075 = vtanh.pop %v2074
    %v2077 = vrot.slane %v2075, 2
    %v2079 = vsub.f32 %v1832, %v2077
    %v2081 = vrot.slane %v2079, 6
    %v2083 = vmul.f32 %v2068, %v2081
    %v2084 = vadd.f32 %v2075, %v2083
    %v2086 = vrot.slane %v2084, 4
    %v2087 = vsel %vm329, %v2086, 0
    %2089 = vmatprep.subr.mxu0 0.0
    %2090 = vmatpush1.msra.mxu0 %v310
    %2091 = vmatprep.subr.mxu0 0.0
    %2092 = vmatpush1.msra.mxu0 %v311
    %2093 = vmatprep.subr.mxu0 0.0
    %2094 = vmatpush1.msra.mxu0 %v312
    %2095 = vmatprep.subr.mxu0 0.0
    %2096 = vmatpush1.msra.mxu0 %v313
    %2097 = vmatprep.subr.mxu0 0.0
    %2098 = vmatpush1.msra.mxu0 0.0
    %2099 = vmatprep.subr.mxu0 0.0
    %2100 = vmatpush1.msra.mxu0 0.0
    %2101 = vmatprep.subr.mxu0 0.0
    %2102 = vmatpush1.msra.mxu0 0.0
    %2103 = vmatprep.subr.mxu0 0.0
    %2104 = vmatpush1.msra.mxu0 0.0
    %2105 = vmatprep.subr.mxu0 0.0
    %2106 = vmatpush1.msra.mxu0 0.0
    %2107 = vmatprep.subr.mxu0 0.0
    %2108 = vmatpush1.msra.mxu0 0.0
    %2109 = vmatprep.subr.mxu0 0.0
    %2110 = vmatpush1.msra.mxu0 0.0
    %2111 = vmatprep.subr.mxu0 0.0
    %2112 = vmatpush1.msra.mxu0 0.0
    %2113 = vmatprep.subr.mxu0 0.0
    %2114 = vmatpush1.msra.mxu0 0.0
    %2115 = vmatprep.subr.mxu0 0.0
    %2116 = vmatpush1.msra.mxu0 0.0
    %2117 = vmatprep.subr.mxu0 0.0
    %2118 = vmatpush1.msra.mxu0 0.0
    %2119 = vmatprep.subr.mxu0 0.0
    %2120 = vmatpush1.msra.mxu0 0.0
    %2121 = vmatprep.subr.mxu0 0.0
    %2122 = vmatpush1.msra.mxu0 0.0
    %2123 = vmatprep.subr.mxu0 0.0
    %2124 = vmatpush1.msra.mxu0 0.0
    %2125 = vmatprep.subr.mxu0 0.0
    %2126 = vmatpush1.msra.mxu0 0.0
    %2127 = vmatprep.subr.mxu0 0.0
    %2128 = vmatpush1.msra.mxu0 0.0
    %2129 = vmatprep.subr.mxu0 0.0
    %2130 = vmatpush1.msra.mxu0 0.0
    %2131 = vmatprep.subr.mxu0 0.0
    %2132 = vmatpush1.msra.mxu0 0.0
    %2133 = vmatprep.subr.mxu0 0.0
    %2134 = vmatpush1.msra.mxu0 0.0
    %2135 = vmatprep.subr.mxu0 0.0
    %2136 = vmatpush1.msra.mxu0 0.0
    %2137 = vmatprep.subr.mxu0 0.0
    %2138 = vmatpush1.msra.mxu0 0.0
    %2139 = vmatprep.subr.mxu0 0.0
    %2140 = vmatpush1.msra.mxu0 0.0
    %2141 = vmatprep.subr.mxu0 0.0
    %2142 = vmatpush1.msra.mxu0 0.0
    %2143 = vmatprep.subr.mxu0 0.0
    %2144 = vmatpush1.msra.mxu0 0.0
    %2145 = vmatprep.subr.mxu0 0.0
    %2146 = vmatpush1.msra.mxu0 0.0
    %2147 = vmatprep.subr.mxu0 0.0
    %2148 = vmatpush1.msra.mxu0 0.0
    %2149 = vmatprep.subr.mxu0 0.0
    %2150 = vmatpush1.msra.mxu0 0.0
    %2151 = vmatprep.subr.mxu0 0.0
    %2152 = vmatpush1.msra.mxu0 0.0
    %2153 = vmatprep.mubr.f32.mxu0 0.0
    %2154 = vmatmul.mubr.f32.gmra.mrb[0].mxu0 %v2087
    %v2155 = vpop.f32.mrb[0].mxu0
    %v2156 = vadd.f32 0.0, %v2155
    %v2157 = vpop.f32.mrb[0].mxu0
    %2158 = vdwg.mxu0
    %2159 = vmatprep.subr.mxu0 0.0
    %2160 = vmatpush1.msra.mxu0 %v315
    %2161 = vmatprep.subr.mxu0 0.0
    %2162 = vmatpush1.msra.mxu0 %v316
    %2163 = vmatprep.subr.mxu0 0.0
    %2164 = vmatpush1.msra.mxu0 %v317
    %2165 = vmatprep.subr.mxu0 0.0
    %2166 = vmatpush1.msra.mxu0 %v318
    %2167 = vmatprep.subr.mxu0 0.0
    %2168 = vmatpush1.msra.mxu0 0.0
    %2169 = vmatprep.subr.mxu0 0.0
    %2170 = vmatpush1.msra.mxu0 0.0
    %2171 = vmatprep.subr.mxu0 0.0
    %2172 = vmatpush1.msra.mxu0 0.0
    %2173 = vmatprep.subr.mxu0 0.0
    %2174 = vmatpush1.msra.mxu0 0.0
    %2175 = vmatprep.subr.mxu0 0.0
    %2176 = vmatpush1.msra.mxu0 0.0
    %2177 = vmatprep.subr.mxu0 0.0
    %2178 = vmatpush1.msra.mxu0 0.0
    %2179 = vmatprep.subr.mxu0 0.0
    %2180 = vmatpush1.msra.mxu0 0.0
    %2181 = vmatprep.subr.mxu0 0.0
    %2182 = vmatpush1.msra.mxu0 0.0
    %2183 = vmatprep.subr.mxu0 0.0
    %2184 = vmatpush1.msra.mxu0 0.0
    %2185 = vmatprep.subr.mxu0 0.0
    %2186 = vmatpush1.msra.mxu0 0.0
    %2187 = vmatprep.subr.mxu0 0.0
    %2188 = vmatpush1.msra.mxu0 0.0
    %2189 = vmatprep.subr.mxu0 0.0
    %2190 = vmatpush1.msra.mxu0 0.0
    %2191 = vmatprep.subr.mxu0 0.0
    %2192 = vmatpush1.msra.mxu0 0.0
    %2193 = vmatprep.subr.mxu0 0.0
    %2194 = vmatpush1.msra.mxu0 0.0
    %2195 = vmatprep.subr.mxu0 0.0
    %2196 = vmatpush1.msra.mxu0 0.0
    %2197 = vmatprep.subr.mxu0 0.0
    %2198 = vmatpush1.msra.mxu0 0.0
    %2199 = vmatprep.subr.mxu0 0.0
    %2200 = vmatpush1.msra.mxu0 0.0
    %2201 = vmatprep.subr.mxu0 0.0
    %2202 = vmatpush1.msra.mxu0 0.0
    %2203 = vmatprep.subr.mxu0 0.0
    %2204 = vmatpush1.msra.mxu0 0.0
    %2205 = vmatprep.subr.mxu0 0.0
    %2206 = vmatpush1.msra.mxu0 0.0
    %2207 = vmatprep.subr.mxu0 0.0
    %2208 = vmatpush1.msra.mxu0 0.0
    %2209 = vmatprep.subr.mxu0 0.0
    %2210 = vmatpush1.msra.mxu0 0.0
    %2211 = vmatprep.subr.mxu0 0.0
    %2212 = vmatpush1.msra.mxu0 0.0
    %2213 = vmatprep.subr.mxu0 0.0
    %2214 = vmatpush1.msra.mxu0 0.0
    %2215 = vmatprep.subr.mxu0 0.0
    %2216 = vmatpush1.msra.mxu0 0.0
    %2217 = vmatprep.subr.mxu0 0.0
    %2218 = vmatpush1.msra.mxu0 0.0
    %2219 = vmatprep.subr.mxu0 0.0
    %2220 = vmatpush1.msra.mxu0 0.0
    %2221 = vmatprep.subr.mxu0 0.0
    %2222 = vmatpush1.msra.mxu0 0.0
    %2223 = vmatprep.mubr.f32.mxu0 0.0
    %2224 = vmatmul.mubr.f32.gmra.mrb[0].mxu0 %v2087
    %v2225 = vpop.f32.mrb[0].mxu0
    %v2226 = vadd.f32 0.0, %v2225
    %v2227 = vpop.f32.mrb[0].mxu0
    %2228 = vdwg.mxu0
    %2229 = vmatprep.subr.mxu0 0.0
    %2230 = vmatpush1.msra.mxu0 %v320
    %2231 = vmatprep.subr.mxu0 0.0
    %2232 = vmatpush1.msra.mxu0 %v321
    %2233 = vmatprep.subr.mxu0 0.0
    %2234 = vmatpush1.msra.mxu0 %v322
    %2235 = vmatprep.subr.mxu0 0.0
    %2236 = vmatpush1.msra.mxu0 %v323
    %2237 = vmatprep.subr.mxu0 0.0
    %2238 = vmatpush1.msra.mxu0 0.0
    %2239 = vmatprep.subr.mxu0 0.0
    %2240 = vmatpush1.msra.mxu0 0.0
    %2241 = vmatprep.subr.mxu0 0.0
    %2242 = vmatpush1.msra.mxu0 0.0
    %2243 = vmatprep.subr.mxu0 0.0
    %2244 = vmatpush1.msra.mxu0 0.0
    %2245 = vmatprep.subr.mxu0 0.0
    %2246 = vmatpush1.msra.mxu0 0.0
    %2247 = vmatprep.subr.mxu0 0.0
    %2248 = vmatpush1.msra.mxu0 0.0
    %2249 = vmatprep.subr.mxu0 0.0
    %2250 = vmatpush1.msra.mxu0 0.0
    %2251 = vmatprep.subr.mxu0 0.0
    %2252 = vmatpush1.msra.mxu0 0.0
    %2253 = vmatprep.subr.mxu0 0.0
    %2254 = vmatpush1.msra.mxu0 0.0
    %2255 = vmatprep.subr.mxu0 0.0
    %2256 = vmatpush1.msra.mxu0 0.0
    %2257 = vmatprep.subr.mxu0 0.0
    %2258 = vmatpush1.msra.mxu0 0.0
    %2259 = vmatprep.subr.mxu0 0.0
    %2260 = vmatpush1.msra.mxu0 0.0
    %2261 = vmatprep.subr.mxu0 0.0
    %2262 = vmatpush1.msra.mxu0 0.0
    %2263 = vmatprep.subr.mxu0 0.0
    %2264 = vmatpush1.msra.mxu0 0.0
    %2265 = vmatprep.subr.mxu0 0.0
    %2266 = vmatpush1.msra.mxu0 0.0
    %2267 = vmatprep.subr.mxu0 0.0
    %2268 = vmatpush1.msra.mxu0 0.0
    %2269 = vmatprep.subr.mxu0 0.0
    %2270 = vmatpush1.msra.mxu0 0.0
    %2271 = vmatprep.subr.mxu0 0.0
    %2272 = vmatpush1.msra.mxu0 0.0
    %2273 = vmatprep.subr.mxu0 0.0
    %2274 = vmatpush1.msra.mxu0 0.0
    %2275 = vmatprep.subr.mxu0 0.0
    %2276 = vmatpush1.msra.mxu0 0.0
    %2277 = vmatprep.subr.mxu0 0.0
    %2278 = vmatpush1.msra.mxu0 0.0
    %2279 = vmatprep.subr.mxu0 0.0
    %2280 = vmatpush1.msra.mxu0 0.0
    %2281 = vmatprep.subr.mxu0 0.0
    %2282 = vmatpush1.msra.mxu0 0.0
    %2283 = vmatprep.subr.mxu0 0.0
    %2284 = vmatpush1.msra.mxu0 0.0
    %2285 = vmatprep.subr.mxu0 0.0
    %2286 = vmatpush1.msra.mxu0 0.0
    %2287 = vmatprep.subr.mxu0 0.0
    %2288 = vmatpush1.msra.mxu0 0.0
    %2289 = vmatprep.subr.mxu0 0.0
    %2290 = vmatpush1.msra.mxu0 0.0
    %2291 = vmatprep.subr.mxu0 0.0
    %2292 = vmatpush1.msra.mxu0 0.0
    %2293 = vmatprep.mubr.f32.mxu0 0.0
    %2294 = vmatmul.mubr.f32.gmra.mrb[0].mxu0 %v2087
    %v2295 = vpop.f32.mrb[0].mxu0
    %v2296 = vadd.f32 0.0, %v2295
    %v2297 = vpop.f32.mrb[0].mxu0
    %2298 = vdwg.mxu0
    %v2300 = vrot.slane %v2156, 2
    %v2302 = vadd.f32 %v141, %v2300
    %v2303 = vadd.f32 %v2302, %v548
    %v2304 = vxor.u32 %v2303, 2147483648
    %v2305 = vmul.f32 %v2304, 1.442695
    %v2306 = vpow.pop %v2305
    %v2307 = vadd.f32 %v2306, 1.0
    %v2308 = vrcp.pop %v2307
    %v2309 = vmul.f32 1.0, %v2308
    %v2311 = vrot.slane %v2226, 2
    %v2313 = vadd.f32 %v224, %v2311
    %v2314 = vadd.f32 %v2313, %v562
    %v2315 = vxor.u32 %v2314, 2147483648
    %v2316 = vmul.f32 %v2315, 1.442695
    %v2317 = vpow.pop %v2316
    %v2318 = vadd.f32 %v2317, 1.0
    %v2319 = vrcp.pop %v2318
    %v2320 = vmul.f32 1.0, %v2319
    %v2322 = vrot.slane %v2296, 2
    %v2324 = vmul.f32 %v2309, %v2322
    %v2325 = vadd.f32 %v307, %v2324
    %v2326 = vadd.f32 %v2325, %v577
    %v2327 = vtanh.pop %v2326
    %v2329 = vrot.slane %v2327, 2
    %v2331 = vsub.f32 %v2084, %v2329
    %v2333 = vrot.slane %v2331, 6
    %v2335 = vmul.f32 %v2320, %v2333
    %v2336 = vadd.f32 %v2327, %v2335
    %v2337 = vld [vmem:[%s4] sm:$0xff]
    %v2338 = vld [vmem:[%s4 + $0x8] sm:$0xff]
    %v2339 = vld [vmem:[%s4 + $0x10] sm:$0xff]
    %v2340 = vld [vmem:[%s4 + $0x18] sm:$0xff]
    %v2341 = vld [vmem:[%s5] sm:$0x1]
    %v2343 = vlaneseq
    %v2344 = vshrl.u32 %v2343, 7
    %v2345 = vsub.s32 0, %v2344
    %v2346 = vrot.slane %v2341, %v2345
    %v2349 = vrot.slane %v2336, 6
    %v2350 = vsel %vm329, %v2349, 0
    %2352 = vmatprep.subr.mxu0 0.0
    %2353 = vmatpush1.msra.mxu0 %v2337
    %2354 = vmatprep.subr.mxu0 0.0
    %2355 = vmatpush1.msra.mxu0 %v2338
    %2356 = vmatprep.subr.mxu0 0.0
    %2357 = vmatpush1.msra.mxu0 %v2339
    %2358 = vmatprep.subr.mxu0 0.0
    %2359 = vmatpush1.msra.mxu0 %v2340
    %2360 = vmatprep.subr.mxu0 0.0
    %2361 = vmatpush1.msra.mxu0 0.0
    %2362 = vmatprep.subr.mxu0 0.0
    %2363 = vmatpush1.msra.mxu0 0.0
    %2364 = vmatprep.subr.mxu0 0.0
    %2365 = vmatpush1.msra.mxu0 0.0
    %2366 = vmatprep.subr.mxu0 0.0
    %2367 = vmatpush1.msra.mxu0 0.0
    %2368 = vmatprep.subr.mxu0 0.0
    %2369 = vmatpush1.msra.mxu0 0.0
    %2370 = vmatprep.subr.mxu0 0.0
    %2371 = vmatpush1.msra.mxu0 0.0
    %2372 = vmatprep.subr.mxu0 0.0
    %2373 = vmatpush1.msra.mxu0 0.0
    %2374 = vmatprep.subr.mxu0 0.0
    %2375 = vmatpush1.msra.mxu0 0.0
    %2376 = vmatprep.subr.mxu0 0.0
    %2377 = vmatpush1.msra.mxu0 0.0
    %2378 = vmatprep.subr.mxu0 0.0
    %2379 = vmatpush1.msra.mxu0 0.0
    %2380 = vmatprep.subr.mxu0 0.0
    %2381 = vmatpush1.msra.mxu0 0.0
    %2382 = vmatprep.subr.mxu0 0.0
    %2383 = vmatpush1.msra.mxu0 0.0
    %2384 = vmatprep.subr.mxu0 0.0
    %2385 = vmatpush1.msra.mxu0 0.0
    %2386 = vmatprep.subr.mxu0 0.0
    %2387 = vmatpush1.msra.mxu0 0.0
    %2388 = vmatprep.subr.mxu0 0.0
    %2389 = vmatpush1.msra.mxu0 0.0
    %2390 = vmatprep.subr.mxu0 0.0
    %2391 = vmatpush1.msra.mxu0 0.0
    %2392 = vmatprep.subr.mxu0 0.0
    %2393 = vmatpush1.msra.mxu0 0.0
    %2394 = vmatprep.subr.mxu0 0.0
    %2395 = vmatpush1.msra.mxu0 0.0
    %2396 = vmatprep.subr.mxu0 0.0
    %2397 = vmatpush1.msra.mxu0 0.0
    %2398 = vmatprep.subr.mxu0 0.0
    %2399 = vmatpush1.msra.mxu0 0.0
    %2400 = vmatprep.subr.mxu0 0.0
    %2401 = vmatpush1.msra.mxu0 0.0
    %2402 = vmatprep.subr.mxu0 0.0
    %2403 = vmatpush1.msra.mxu0 0.0
    %2404 = vmatprep.subr.mxu0 0.0
    %2405 = vmatpush1.msra.mxu0 0.0
    %2406 = vmatprep.subr.mxu0 0.0
    %2407 = vmatpush1.msra.mxu0 0.0
    %2408 = vmatprep.subr.mxu0 0.0
    %2409 = vmatpush1.msra.mxu0 0.0
    %2410 = vmatprep.subr.mxu0 0.0
    %2411 = vmatpush1.msra.mxu0 0.0
    %2412 = vmatprep.subr.mxu0 0.0
    %2413 = vmatpush1.msra.mxu0 0.0
    %2414 = vmatprep.subr.mxu0 0.0
    %2415 = vmatpush1.msra.mxu0 0.0
    %2416 = vmatprep.mubr.f32.mxu0 0.0
    %2417 = vmatmul.mubr.f32.gmra.mrb[0].mxu0 %v2350
    %v2418 = vpop.f32.mrb[0].mxu0
    %v2419 = vadd.f32 %v2346, %v2418
    %v2420 = vpop.f32.mrb[0].mxu0
    %2421 = vdwg.mxu0
    %vm2422 = vcmask 74752
    %2423 = vst.msk [vmem:[#allocation7] sm:$0x3] %vm2422, %v2419
    // Predicated region
    $region34: #{tpu_custom_call.1} parent=1 // pred_check
      _
    $region35: #{tpu_custom_call.1} parent=1 // pred_check_branch
      %2425 = sbr.rel (0) target = $region37
    $region36: #{tpu_custom_call.1} parent=1 // pred_region
      %s2427 = ssub.s32 32, 32
      %2428 = vsyncadd [#allocation4], %s2427
      %s2430 = sshll.u32 [#allocation7], 4
      %s2431 = int_to_ptr.vmem [resolvable:$true] %s2430
      %2433 = dma.vmem_to_hbm [thread:$0]  %s2431, 32, %s6, [#allocation4]
    $region37: #{tpu_custom_call.1} parent=1 // pred_fallthru
      _
    // Predicated region
    $region38: #{tpu_custom_call.1} parent=1 // pred_check
      _
    $region39: #{tpu_custom_call.1} parent=1 // pred_check_branch
      %2435 = sbr.rel (0) target = $region41
    $region40: #{tpu_custom_call.1} parent=1 // pred_region
      %2436 = dma.done [#allocation4], 32
    $region41: #{tpu_custom_call.1} parent=1 // pred_fallthru
      _
    %2437 = vsyncpa [#allocation3], 1
    %2438 = vsyncpa [#allocation6], 1
    %2439 = vsyncpa [#allocation4], 1

</llo_original>
